<compile_context>
chip_gen: v7x
topology: tpu7x:2x2x1
jax: 0.10.0
libtpu: 0.0.40
codegen_flags: <defaults>
</compile_context>

<pallas_src>
import functools
import math

import jax
import jax.numpy as jnp
from jax import lax
from jax.experimental import pallas as pl
from jax.experimental.pallas import tpu as pltpu


# ---------------------------------------------------------------------------
# Fused flash multi-head attention kernel
#   grid = (batch, q-tile, k-tile);  k-tile is the innermost ("arbitrary") axis
# ---------------------------------------------------------------------------

def _flash_mha_kernel(*refs, n_heads, has_mask):
    if has_mask:
        (q_ref, k_ref, v_ref, wqkv_ref, bqkv_ref, wo_ref, bo_ref, mask_ref,
         o_ref, q_sc, m_sc, l_sc, acc_sc) = refs
    else:
        (q_ref, k_ref, v_ref, wqkv_ref, bqkv_ref, wo_ref, bo_ref,
         o_ref, q_sc, m_sc, l_sc, acc_sc) = refs
        mask_ref = None

    ki = pl.program_id(2)
    H = wo_ref.shape[0]
    d = H // n_heads

    # ---- per-(batch, q-tile) init: project Q once, reset flash state -------
    @pl.when(ki == 0)
    def _init():
        # inv_scale is already folded into w_q / b_q (prepare_attention_params)
        qp = jnp.dot(q_ref[0].astype(jnp.bfloat16), wqkv_ref[:, :H],
                     preferred_element_type=jnp.float32) + bqkv_ref[:, :H]
        q_sc[...] = qp.astype(jnp.bfloat16)
        m_sc[...] = jnp.full(m_sc.shape, -jnp.inf, jnp.float32)
        l_sc[...] = jnp.zeros(l_sc.shape, jnp.float32)
        acc_sc[...] = jnp.zeros(acc_sc.shape, jnp.float32)

    # ---- project K / V for this key tile (bf16 weights resident in VMEM) ---
    kp = (jnp.dot(k_ref[0].astype(jnp.bfloat16), wqkv_ref[:, H:2 * H],
                  preferred_element_type=jnp.float32)
          + bqkv_ref[:, H:2 * H]).astype(jnp.bfloat16)            # (tk, H)
    vp = (jnp.dot(v_ref[0].astype(jnp.bfloat16), wqkv_ref[:, 2 * H:],
                  preferred_element_type=jnp.float32)
          + bqkv_ref[:, 2 * H:]).astype(jnp.bfloat16)             # (tk, H)

    # Mask predicate hoisted out of the head loop; broadcasts over heads/rows.
    masked = (mask_ref[0] == 0) if has_mask else None             # (mq, tk)

    q_all = q_sc[...]                                             # (tq, H) bf16

    for h in range(n_heads):                                      # static unroll
        sl = slice(h * d, (h + 1) * d)
        # QK^T contracted last-vs-last: no in-kernel transpose.
        energy = lax.dot_general(q_all[:, sl], kp[:, sl],
                                 (((1,), (1,)), ((), ())),
                                 preferred_element_type=jnp.float32)  # (tq, tk)
        if has_mask:
            energy = jnp.where(masked, -1.0e10, energy)
        m_prev = m_sc[h]                                          # (tq, 1)
        m_new = jnp.maximum(m_prev, jnp.max(energy, axis=-1, keepdims=True))
        alpha = jnp.exp(m_prev - m_new)                           # (tq, 1)
        p = jnp.exp(energy - m_new)                               # (tq, tk)
        l_sc[h] = alpha * l_sc[h] + jnp.sum(p, axis=-1, keepdims=True)
        m_sc[h] = m_new
        pv = jnp.dot(p.astype(jnp.bfloat16), vp[:, sl],
                     preferred_element_type=jnp.float32)          # (tq, d)
        # Merge heads by writing static lane offsets -- no concatenate.
        acc_sc[:, sl] = alpha * acc_sc[:, sl] + pv

    # ---- finalize after last key tile: normalize + output projection -------
    @pl.when(ki == pl.num_programs(2) - 1)
    def _finalize():
        for h in range(n_heads):
            sl = slice(h * d, (h + 1) * d)
            inv_l = pl.reciprocal(l_sc[h], approx=True)           # (tq, 1)
            acc_sc[:, sl] = acc_sc[:, sl] * inv_l
        out = jnp.dot(acc_sc[...].astype(jnp.bfloat16), wo_ref[...],
                      preferred_element_type=jnp.float32) + bo_ref[...]
        o_ref[0] = out.astype(o_ref.dtype)    # attention dropout = identity


# ---------------------------------------------------------------------------
# Parameter prep (done once, not in the hot path)
# ---------------------------------------------------------------------------

def prepare_attention_params(params, n_heads):
    """Concatenate QKV weights, fold in 1/sqrt(d), pre-cast to bf16."""
    H = params["wq"].shape[0]
    assert H % n_heads == 0
    inv_scale = 1.0 / math.sqrt(H // n_heads)
    w_qkv = jnp.concatenate(
        [params["wq"] * inv_scale, params["wk"], params["wv"]],
        axis=1).astype(jnp.bfloat16)                               # (H, 3H)
    b_qkv = jnp.concatenate(
        [params["bq"] * inv_scale, params["bk"], params["bv"]]
    ).reshape(1, 3 * H).astype(jnp.float32)                        # (1, 3H)
    return dict(w_qkv=w_qkv, b_qkv=b_qkv,
                wo=params["wo"].astype(jnp.bfloat16),              # (H, H)
                bo=params["bo"].reshape(1, H).astype(jnp.float32)) # (1, H)


def _pick_tile(length, max_tile, align):
    if length <= max_tile:
        return length
    for t in range(max_tile, align - 1, -1):
        if length % t == 0 and t % align == 0:
            return t
    return length


# ---------------------------------------------------------------------------
# Wrapper
# ---------------------------------------------------------------------------

def self_attention(query, key, value, prepared, n_heads, mask=None, *,
                   tq=None, tk=None):
    """Pallas forward of SelfAttention.forward(query, key, value, mask).

    `prepared` comes from prepare_attention_params().  `mask` may be
    (B, Lq, Lk) or a compact key-padding (B, 1, Lk); 0 = masked out.
    """
    B, Lq, H = query.shape
    Lk = key.shape[1]
    assert H % n_heads == 0
    if tq is None:
        tq = _pick_tile(Lq, 512, 8)     # q tiles: "parallel" grid axis
    if tk is None:
        tk = _pick_tile(Lk, 1024, 128)  # k tiles: "arbitrary" (flash) axis
    assert Lq % tq == 0 and Lk % tk == 0
    nq, nk = Lq // tq, Lk // tk
    has_mask = mask is not None

    const = lambda b, qi, ki: (0, 0)
    in_specs = [
        pl.BlockSpec((1, tq, H), lambda b, qi, ki: (b, qi, 0)),    # query
        pl.BlockSpec((1, tk, H), lambda b, qi, ki: (b, ki, 0)),    # key
        pl.BlockSpec((1, tk, H), lambda b, qi, ki: (b, ki, 0)),    # value
        pl.BlockSpec((H, 3 * H), const),                           # w_qkv (bf16)
        pl.BlockSpec((1, 3 * H), const),                           # b_qkv
        pl.BlockSpec((H, H), const),                               # w_o (bf16)
        pl.BlockSpec((1, H), const),                               # b_o
    ]
    inputs = [query, key, value, prepared["w_qkv"], prepared["b_qkv"],
              prepared["wo"], prepared["bo"]]

    mq = 0
    if has_mask:
        assert mask.shape[0] == B and mask.shape[2] == Lk
        mask_full_q = (mask.shape[1] == Lq)
        assert mask_full_q or mask.shape[1] == 1
        mq = tq if mask_full_q else 1
        if mask_full_q:
            mask_map = lambda b, qi, ki: (b, qi, ki)
        else:
            mask_map = lambda b, qi, ki: (b, 0, ki)
        in_specs.append(pl.BlockSpec((1, mq, tk), mask_map))
        inputs.append(mask.astype(jnp.bfloat16))   # small-dtype mask DMA

    scratch_shapes = [
        pltpu.VMEM((tq, H), jnp.bfloat16),          # projected, pre-scaled Q
        pltpu.VMEM((n_heads, tq, 1), jnp.float32),  # running max  m
        pltpu.VMEM((n_heads, tq, 1), jnp.float32),  # running sum  l
        pltpu.VMEM((tq, H), jnp.float32),           # unnormalized head outputs
    ]

    # Scoped-VMEM limit sized to the resident set (2x headroom, <= 64 MiB so it
    # is safe on v7x; v5e/v6e have 128 MiB physical).
    in_bytes = query.dtype.itemsize
    weight_bytes = 2 * H * 3 * H + 2 * H * H + 4 * (3 * H + H)
    block_bytes = 2 * (tq * H * in_bytes + 2 * tk * H * in_bytes + tq * H * 4)
    if has_mask:
        block_bytes += 2 * mq * tk * 2
    scratch_bytes = tq * H * 2 + 2 * n_heads * tq * 4 + tq * H * 4
    work_bytes = 2 * tq * tk * 4 + 2 * tk * H * 2 + tq * H * 4
    vmem_limit = int(min(max(2 * (weight_bytes + block_bytes + scratch_bytes
                                  + work_bytes), 32 * 1024 * 1024),
                         64 * 1024 * 1024))

    kernel = functools.partial(_flash_mha_kernel, n_heads=n_heads,
                               has_mask=has_mask)
    return pl.pallas_call(
        kernel,
        out_shape=jax.ShapeDtypeStruct((B, Lq, H), jnp.float32),
        grid_spec=pltpu.PrefetchScalarGridSpec(
            num_scalar_prefetch=0,
            grid=(B, nq, nk),
            in_specs=in_specs,
            out_specs=pl.BlockSpec((1, tq, H), lambda b, qi, ki: (b, qi, 0)),
            scratch_shapes=scratch_shapes),
        compiler_params=pltpu.CompilerParams(
            dimension_semantics=("parallel", "parallel", "arbitrary"),
            vmem_limit_bytes=vmem_limit),
    )(*inputs)


# ---------------------------------------------------------------------------
# Pure-JAX f32 reference (mirrors the PyTorch module exactly)
# ---------------------------------------------------------------------------

def self_attention_ref(query, key, value, params, n_heads, mask=None):
    B, Lq, H = query.shape
    Lk = key.shape[1]
    d = H // n_heads
    Q = query @ params["wq"] + params["bq"]
    K = key @ params["wk"] + params["bk"]
    V = value @ params["wv"] + params["bv"]
    Q = Q.reshape(B, Lq, n_heads, d).transpose(0, 2, 1, 3)
    K = K.reshape(B, Lk, n_heads, d).transpose(0, 2, 1, 3)
    V = V.reshape(B, Lk, n_heads, d).transpose(0, 2, 1, 3)
    energy = jnp.einsum("bhqd,bhkd->bhqk", Q, K) / math.sqrt(d)
    if mask is not None:
        energy = jnp.where(mask[:, None, :, :] == 0, -1.0e10, energy)
    attn = jax.nn.softmax(energy, axis=-1)
    x = jnp.einsum("bhqk,bhkd->bhqd", attn, V)
    x = x.transpose(0, 2, 1, 3).reshape(B, Lq, H)
    return x @ params["wo"] + params["bo"]


# ---------------------------------------------------------------------------
# Deterministic parameter init (PyTorch nn.Linear uniform fan-in init)
# ---------------------------------------------------------------------------

def init_self_attention_params(key, hid_dim):
    def lin(k, fan_in, fan_out):
        kw, kb = jax.random.split(k)
        bound = 1.0 / math.sqrt(fan_in)
        w = jax.random.uniform(kw, (fan_in, fan_out), jnp.float32, -bound, bound)
        b = jax.random.uniform(kb, (fan_out,), jnp.float32, -bound, bound)
        return w, b

    kq, kk, kv, ko = jax.random.split(key, 4)
    wq, bq = lin(kq, hid_dim, hid_dim)
    wk, bk = lin(kk, hid_dim, hid_dim)
    wv, bv = lin(kv, hid_dim, hid_dim)
    wo, bo = lin(ko, hid_dim, hid_dim)
    return dict(wq=wq, bq=bq, wk=wk, bk=bk, wv=wv, bv=bv, wo=wo, bo=bo)


# ---------------------------------------------------------------------------

if __name__ == "__main__":
    root = jax.random.PRNGKey(0)
    k_par, k_x, k_src, k_m, k_x2 = jax.random.split(root, 5)

    # --- 1) true self-attention, lane-aligned hid_dim, no mask --------------
    B, L, H, n_heads = 2, 8, 128, 4
    params = init_self_attention_params(k_par, H)
    prep = prepare_attention_params(params, n_heads)
    x = jax.random.normal(k_x, (B, L, H), jnp.float32)
    out = jax.block_until_ready(self_attention(x, x, x, prep, n_heads))
    assert out.shape == (B, L, H) and out.dtype == jnp.float32
    ref = self_attention_ref(x, x, x, params, n_heads)
    err = float(jnp.max(jnp.abs(out - ref)))
    assert err < 0.1, f"self-attention mismatch: max |err| = {err}"

    # --- 2) cross-attention with compact (B, 1, Lk) key-padding mask --------
    Lk = 12
    src = jax.random.normal(k_src, (B, Lk, H), jnp.float32)
    lens = jnp.array([Lk, 7], jnp.int32)
    key_mask = (jnp.arange(Lk)[None, :] < lens[:, None]).astype(jnp.float32)
    key_mask = key_mask[:, None, :]                               # (B, 1, Lk)
    out2 = jax.block_until_ready(
        self_attention(x, src, src, prep, n_heads, mask=key_mask))
    ref2 = self_attention_ref(x, src, src, params, n_heads, mask=key_mask)
    err2 = float(jnp.max(jnp.abs(out2 - ref2)))
    assert err2 < 0.1, f"cross-attention mismatch: max |err| = {err2}"

    # --- 3) multi-tile flash path: 2 q-tiles x 2 k-tiles + full mask --------
    B3, Lq3, Lk3 = 1, 16, 256
    x3 = jax.random.normal(k_x2, (B3, Lq3, H), jnp.float32)
    src3 = jax.random.normal(k_src, (B3, Lk3, H), jnp.float32)
    m3 = (jax.random.uniform(k_m, (B3, Lq3, Lk3)) > 0.3).astype(jnp.float32)
    m3 = m3.at[:, :, 0].set(1.0)   # every query row sees at least one key
    out3 = jax.block_until_ready(
        self_attention(x3, src3, src3, prep, n_heads, mask=m3, tq=8, tk=128))
    ref3 = self_attention_ref(x3, src3, src3, params, n_heads, mask=m3)
    err3 = float(jnp.max(jnp.abs(out3 - ref3)))
    assert err3 < 0.1, f"flash-tiled mismatch: max |err| = {err3}"

    print("KERNEL_OK")
</pallas_src>

<mosaic_0001>
module attributes {stable_mosaic.version = 11 : i64} {
  func.func @_flash_mha_kernel(%arg0: i32, %arg1: i32, %arg2: i32, %arg3: memref<1x8x128xf32, #tpu.memory_space<vmem>>, %arg4: memref<1x8x128xf32, #tpu.memory_space<vmem>>, %arg5: memref<1x8x128xf32, #tpu.memory_space<vmem>>, %arg6: memref<128x384xbf16, #tpu.memory_space<vmem>>, %arg7: memref<1x384xf32, #tpu.memory_space<vmem>>, %arg8: memref<128x128xbf16, #tpu.memory_space<vmem>>, %arg9: memref<1x128xf32, #tpu.memory_space<vmem>>, %arg10: memref<1x8x128xf32, #tpu.memory_space<vmem>>, %arg11: memref<8x128xbf16, #tpu.memory_space<vmem>>, %arg12: memref<4x8x1xf32, #tpu.memory_space<vmem>>, %arg13: memref<4x8x1xf32, #tpu.memory_space<vmem>>, %arg14: memref<8x128xf32, #tpu.memory_space<vmem>>) attributes {dimension_semantics = [#tpu.dimension_semantics<parallel>, #tpu.dimension_semantics<parallel>, #tpu.dimension_semantics<arbitrary>], iteration_bounds = array<i64: 2, 1, 1>, scalar_prefetch = 0 : i64, scratch_operands = 4 : i64, tpu.core_type = #tpu.core_type<tc>, window_params = [{transform_indices = @transform_0, window_bounds = array<i64: 1, 8, 128>}, {transform_indices = @transform_1, window_bounds = array<i64: 1, 8, 128>}, {transform_indices = @transform_2, window_bounds = array<i64: 1, 8, 128>}, {pipeline_mode = #tpu.pipeline_mode<synchronous>, transform_indices = @transform_3, window_bounds = array<i64: 128, 384>}, {pipeline_mode = #tpu.pipeline_mode<synchronous>, transform_indices = @transform_4, window_bounds = array<i64: 1, 384>}, {pipeline_mode = #tpu.pipeline_mode<synchronous>, transform_indices = @transform_5, window_bounds = array<i64: 128, 128>}, {pipeline_mode = #tpu.pipeline_mode<synchronous>, transform_indices = @transform_6, window_bounds = array<i64: 1, 128>}, {transform_indices = @transform_7, window_bounds = array<i64: 1, 8, 128>}]} {
    %c0_i32 = arith.constant 0 : i32
    %0 = arith.cmpi eq, %arg2, %c0_i32 : i32
    %1 = arith.extui %0 : i1 to i32
    %c0_i32_0 = arith.constant 0 : i32
    %2 = arith.cmpi ne, %1, %c0_i32_0 : i32
    scf.if %2 {
      %c0_91 = arith.constant 0 : index
      %c0_92 = arith.constant 0 : index
      %c0_93 = arith.constant 0 : index
      %157 = vector.load %arg3[%c0_91, %c0_92, %c0_93] : memref<1x8x128xf32, #tpu.memory_space<vmem>>, vector<1x8x128xf32>
      %158 = vector.shape_cast %157 : vector<1x8x128xf32> to vector<8x128xf32>
      %159 = arith.truncf %158 : vector<8x128xf32> to vector<8x128xbf16>
      %c0_94 = arith.constant 0 : index
      %c0_95 = arith.constant 0 : index
      %160 = vector.load %arg6[%c0_94, %c0_95] : memref<128x384xbf16, #tpu.memory_space<vmem>>, vector<128x128xbf16>
      %cst_96 = arith.constant dense<0.000000e+00> : vector<8x128xf32>
      %161 = tpu.matmul %159, %160, %cst_96 {dimension_numbers = #tpu.dot_dimension_numbers<[1], [0], [0], [1], [0, 0, 1, 1], [], []>} : vector<8x128xbf16>, vector<128x128xbf16>, vector<8x128xf32> -> vector<8x128xf32>
      %c0_97 = arith.constant 0 : index
      %c0_98 = arith.constant 0 : index
      %162 = vector.load %arg7[%c0_97, %c0_98] : memref<1x384xf32, #tpu.memory_space<vmem>>, vector<1x128xf32>
      %163 = vector.broadcast %162 : vector<1x128xf32> to vector<8x128xf32>
      %164 = arith.addf %161, %163 : vector<8x128xf32>
      %165 = arith.truncf %164 : vector<8x128xf32> to vector<8x128xbf16>
      %c0_99 = arith.constant 0 : index
      %c0_100 = arith.constant 0 : index
      %166 = vector.load %arg11[%c0_99, %c0_100] : memref<8x128xbf16, #tpu.memory_space<vmem>>, vector<8x128xbf16>
      tpu.vector_store %arg11[%c0_99, %c0_100], %165 {strides = array<i32>} : memref<8x128xbf16, #tpu.memory_space<vmem>>, vector<8x128xbf16>,
      %cst_101 = arith.constant 0xFF800000 : f32
      %167 = vector.broadcast %cst_101 : f32 to vector<4x8x1xf32>
      %c0_102 = arith.constant 0 : index
      %c0_103 = arith.constant 0 : index
      %c0_104 = arith.constant 0 : index
      %168 = vector.load %arg12[%c0_102, %c0_103, %c0_104] : memref<4x8x1xf32, #tpu.memory_space<vmem>>, vector<4x8x1xf32>
      tpu.vector_store %arg12[%c0_102, %c0_103, %c0_104], %167 {strides = array<i32>} : memref<4x8x1xf32, #tpu.memory_space<vmem>>, vector<4x8x1xf32>,
      %cst_105 = arith.constant 0.000000e+00 : f32
      %169 = vector.broadcast %cst_105 : f32 to vector<4x8x1xf32>
      %c0_106 = arith.constant 0 : index
      %c0_107 = arith.constant 0 : index
      %c0_108 = arith.constant 0 : index
      %170 = vector.load %arg13[%c0_106, %c0_107, %c0_108] : memref<4x8x1xf32, #tpu.memory_space<vmem>>, vector<4x8x1xf32>
      tpu.vector_store %arg13[%c0_106, %c0_107, %c0_108], %169 {strides = array<i32>} : memref<4x8x1xf32, #tpu.memory_space<vmem>>, vector<4x8x1xf32>,
      %cst_109 = arith.constant 0.000000e+00 : f32
      %171 = vector.broadcast %cst_109 : f32 to vector<8x128xf32>
      %c0_110 = arith.constant 0 : index
      %c0_111 = arith.constant 0 : index
      %172 = vector.load %arg14[%c0_110, %c0_111] : memref<8x128xf32, #tpu.memory_space<vmem>>, vector<8x128xf32>
      tpu.vector_store %arg14[%c0_110, %c0_111], %171 {strides = array<i32>} : memref<8x128xf32, #tpu.memory_space<vmem>>, vector<8x128xf32>,
    } else {
    }
    %c0 = arith.constant 0 : index
    %c0_1 = arith.constant 0 : index
    %c0_2 = arith.constant 0 : index
    %3 = vector.load %arg4[%c0, %c0_1, %c0_2] : memref<1x8x128xf32, #tpu.memory_space<vmem>>, vector<1x8x128xf32>
    %4 = vector.shape_cast %3 : vector<1x8x128xf32> to vector<8x128xf32>
    %5 = arith.truncf %4 : vector<8x128xf32> to vector<8x128xbf16>
    %c0_3 = arith.constant 0 : index
    %c128 = arith.constant 128 : index
    %6 = vector.load %arg6[%c0_3, %c128] : memref<128x384xbf16, #tpu.memory_space<vmem>>, vector<128x128xbf16>
    %cst = arith.constant dense<0.000000e+00> : vector<8x128xf32>
    %7 = tpu.matmul %5, %6, %cst {dimension_numbers = #tpu.dot_dimension_numbers<[1], [0], [0], [1], [0, 0, 1, 1], [], []>} : vector<8x128xbf16>, vector<128x128xbf16>, vector<8x128xf32> -> vector<8x128xf32>
    %c0_4 = arith.constant 0 : index
    %c128_5 = arith.constant 128 : index
    %8 = vector.load %arg7[%c0_4, %c128_5] : memref<1x384xf32, #tpu.memory_space<vmem>>, vector<1x128xf32>
    %9 = vector.broadcast %8 : vector<1x128xf32> to vector<8x128xf32>
    %10 = arith.addf %7, %9 : vector<8x128xf32>
    %11 = arith.truncf %10 : vector<8x128xf32> to vector<8x128xbf16>
    %c0_6 = arith.constant 0 : index
    %c0_7 = arith.constant 0 : index
    %c0_8 = arith.constant 0 : index
    %12 = vector.load %arg5[%c0_6, %c0_7, %c0_8] : memref<1x8x128xf32, #tpu.memory_space<vmem>>, vector<1x8x128xf32>
    %13 = vector.shape_cast %12 : vector<1x8x128xf32> to vector<8x128xf32>
    %14 = arith.truncf %13 : vector<8x128xf32> to vector<8x128xbf16>
    %c0_9 = arith.constant 0 : index
    %c256 = arith.constant 256 : index
    %15 = vector.load %arg6[%c0_9, %c256] : memref<128x384xbf16, #tpu.memory_space<vmem>>, vector<128x128xbf16>
    %cst_10 = arith.constant dense<0.000000e+00> : vector<8x128xf32>
    %16 = tpu.matmul %14, %15, %cst_10 {dimension_numbers = #tpu.dot_dimension_numbers<[1], [0], [0], [1], [0, 0, 1, 1], [], []>} : vector<8x128xbf16>, vector<128x128xbf16>, vector<8x128xf32> -> vector<8x128xf32>
    %c0_11 = arith.constant 0 : index
    %c256_12 = arith.constant 256 : index
    %17 = vector.load %arg7[%c0_11, %c256_12] : memref<1x384xf32, #tpu.memory_space<vmem>>, vector<1x128xf32>
    %18 = vector.broadcast %17 : vector<1x128xf32> to vector<8x128xf32>
    %19 = arith.addf %16, %18 : vector<8x128xf32>
    %20 = arith.truncf %19 : vector<8x128xf32> to vector<8x128xbf16>
    %c0_13 = arith.constant 0 : index
    %c0_14 = arith.constant 0 : index
    %21 = vector.load %arg11[%c0_13, %c0_14] : memref<8x128xbf16, #tpu.memory_space<vmem>>, vector<8x128xbf16>
    %22 = vector.extract_strided_slice %21 {offsets = [0, 0], sizes = [8, 32], strides = [1, 1]} : vector<8x128xbf16> to vector<8x32xbf16>
    %23 = vector.extract_strided_slice %11 {offsets = [0, 0], sizes = [8, 32], strides = [1, 1]} : vector<8x128xbf16> to vector<8x32xbf16>
    %cst_15 = arith.constant dense<0.000000e+00> : vector<8x8xf32>
    %24 = tpu.matmul %22, %23, %cst_15 {dimension_numbers = #tpu.dot_dimension_numbers<[1], [1], [0], [0], [0, 0, 1, 0], [], []>} : vector<8x32xbf16>, vector<8x32xbf16>, vector<8x8xf32> -> vector<8x8xf32>
    %c0_16 = arith.constant 0 : index
    %c0_17 = arith.constant 0 : index
    %c0_18 = arith.constant 0 : index
    %25 = vector.load %arg12[%c0_16, %c0_17, %c0_18] : memref<4x8x1xf32, #tpu.memory_space<vmem>>, vector<1x8x1xf32>
    %26 = vector.shape_cast %25 : vector<1x8x1xf32> to vector<8x1xf32>
    %cst_19 = arith.constant dense<0xFF800000> : vector<8xf32>
    %27 = vector.multi_reduction <maximumf>, %24, %cst_19 [1] : vector<8x8xf32> to vector<8xf32>
    %28 = vector.shape_cast %27 : vector<8xf32> to vector<8x1xf32>
    %29 = arith.maximumf %26, %28 : vector<8x1xf32>
    %30 = arith.subf %26, %29 : vector<8x1xf32>
    %31 = math.exp %30 : vector<8x1xf32>
    %32 = vector.broadcast %29 : vector<8x1xf32> to vector<8x8xf32>
    %33 = arith.subf %24, %32 : vector<8x8xf32>
    %34 = math.exp %33 : vector<8x8xf32>
    %c0_20 = arith.constant 0 : index
    %c0_21 = arith.constant 0 : index
    %c0_22 = arith.constant 0 : index
    %35 = vector.load %arg13[%c0_20, %c0_21, %c0_22] : memref<4x8x1xf32, #tpu.memory_space<vmem>>, vector<1x8x1xf32>
    %36 = vector.shape_cast %35 : vector<1x8x1xf32> to vector<8x1xf32>
    %37 = arith.mulf %31, %36 : vector<8x1xf32>
    %cst_23 = arith.constant dense<0.000000e+00> : vector<8xf32>
    %38 = vector.multi_reduction <add>, %34, %cst_23 [1] : vector<8x8xf32> to vector<8xf32>
    %39 = vector.shape_cast %38 : vector<8xf32> to vector<8x1xf32>
    %40 = arith.addf %37, %39 : vector<8x1xf32>
    %c0_24 = arith.constant 0 : index
    %c0_25 = arith.constant 0 : index
    %c0_26 = arith.constant 0 : index
    %41 = vector.load %arg13[%c0_24, %c0_25, %c0_26] : memref<4x8x1xf32, #tpu.memory_space<vmem>>, vector<1x8x1xf32>
    %42 = vector.shape_cast %41 : vector<1x8x1xf32> to vector<8x1xf32>
    %43 = vector.shape_cast %40 : vector<8x1xf32> to vector<1x8x1xf32>
    tpu.vector_store %arg13[%c0_24, %c0_25, %c0_26], %43 {strides = array<i32>} : memref<4x8x1xf32, #tpu.memory_space<vmem>>, vector<1x8x1xf32>,
    %c0_27 = arith.constant 0 : index
    %c0_28 = arith.constant 0 : index
    %c0_29 = arith.constant 0 : index
    %44 = vector.load %arg12[%c0_27, %c0_28, %c0_29] : memref<4x8x1xf32, #tpu.memory_space<vmem>>, vector<1x8x1xf32>
    %45 = vector.shape_cast %44 : vector<1x8x1xf32> to vector<8x1xf32>
    %46 = vector.shape_cast %29 : vector<8x1xf32> to vector<1x8x1xf32>
    tpu.vector_store %arg12[%c0_27, %c0_28, %c0_29], %46 {strides = array<i32>} : memref<4x8x1xf32, #tpu.memory_space<vmem>>, vector<1x8x1xf32>,
    %47 = arith.truncf %34 : vector<8x8xf32> to vector<8x8xbf16>
    %48 = vector.extract_strided_slice %20 {offsets = [0, 0], sizes = [8, 32], strides = [1, 1]} : vector<8x128xbf16> to vector<8x32xbf16>
    %cst_30 = arith.constant dense<0.000000e+00> : vector<8x32xf32>
    %49 = tpu.matmul %47, %48, %cst_30 {dimension_numbers = #tpu.dot_dimension_numbers<[1], [0], [0], [1], [0, 0, 1, 1], [], []>} : vector<8x8xbf16>, vector<8x32xbf16>, vector<8x32xf32> -> vector<8x32xf32>
    %c0_31 = arith.constant 0 : index
    %c0_32 = arith.constant 0 : index
    %50 = vector.load %arg14[%c0_31, %c0_32] : memref<8x128xf32, #tpu.memory_space<vmem>>, vector<8x32xf32>
    %51 = vector.broadcast %31 : vector<8x1xf32> to vector<8x32xf32>
    %52 = arith.mulf %51, %50 : vector<8x32xf32>
    %53 = arith.addf %52, %49 : vector<8x32xf32>
    %c0_33 = arith.constant 0 : index
    %c0_34 = arith.constant 0 : index
    %54 = vector.load %arg14[%c0_33, %c0_34] : memref<8x128xf32, #tpu.memory_space<vmem>>, vector<8x32xf32>
    tpu.vector_store %arg14[%c0_33, %c0_34], %53 {strides = array<i32>} : memref<8x128xf32, #tpu.memory_space<vmem>>, vector<8x32xf32>,
    %55 = vector.extract_strided_slice %21 {offsets = [0, 32], sizes = [8, 32], strides = [1, 1]} : vector<8x128xbf16> to vector<8x32xbf16>
    %56 = vector.extract_strided_slice %11 {offsets = [0, 32], sizes = [8, 32], strides = [1, 1]} : vector<8x128xbf16> to vector<8x32xbf16>
    %cst_35 = arith.constant dense<0.000000e+00> : vector<8x8xf32>
    %57 = tpu.matmul %55, %56, %cst_35 {dimension_numbers = #tpu.dot_dimension_numbers<[1], [1], [0], [0], [0, 0, 1, 0], [], []>} : vector<8x32xbf16>, vector<8x32xbf16>, vector<8x8xf32> -> vector<8x8xf32>
    %c1 = arith.constant 1 : index
    %c0_36 = arith.constant 0 : index
    %c0_37 = arith.constant 0 : index
    %58 = vector.load %arg12[%c1, %c0_36, %c0_37] : memref<4x8x1xf32, #tpu.memory_space<vmem>>, vector<1x8x1xf32>
    %59 = vector.shape_cast %58 : vector<1x8x1xf32> to vector<8x1xf32>
    %cst_38 = arith.constant dense<0xFF800000> : vector<8xf32>
    %60 = vector.multi_reduction <maximumf>, %57, %cst_38 [1] : vector<8x8xf32> to vector<8xf32>
    %61 = vector.shape_cast %60 : vector<8xf32> to vector<8x1xf32>
    %62 = arith.maximumf %59, %61 : vector<8x1xf32>
    %63 = arith.subf %59, %62 : vector<8x1xf32>
    %64 = math.exp %63 : vector<8x1xf32>
    %65 = vector.broadcast %62 : vector<8x1xf32> to vector<8x8xf32>
    %66 = arith.subf %57, %65 : vector<8x8xf32>
    %67 = math.exp %66 : vector<8x8xf32>
    %c1_39 = arith.constant 1 : index
    %c0_40 = arith.constant 0 : index
    %c0_41 = arith.constant 0 : index
    %68 = vector.load %arg13[%c1_39, %c0_40, %c0_41] : memref<4x8x1xf32, #tpu.memory_space<vmem>>, vector<1x8x1xf32>
    %69 = vector.shape_cast %68 : vector<1x8x1xf32> to vector<8x1xf32>
    %70 = arith.mulf %64, %69 : vector<8x1xf32>
    %cst_42 = arith.constant dense<0.000000e+00> : vector<8xf32>
    %71 = vector.multi_reduction <add>, %67, %cst_42 [1] : vector<8x8xf32> to vector<8xf32>
    %72 = vector.shape_cast %71 : vector<8xf32> to vector<8x1xf32>
    %73 = arith.addf %70, %72 : vector<8x1xf32>
    %c1_43 = arith.constant 1 : index
    %c0_44 = arith.constant 0 : index
    %c0_45 = arith.constant 0 : index
    %74 = vector.load %arg13[%c1_43, %c0_44, %c0_45] : memref<4x8x1xf32, #tpu.memory_space<vmem>>, vector<1x8x1xf32>
    %75 = vector.shape_cast %74 : vector<1x8x1xf32> to vector<8x1xf32>
    %76 = vector.shape_cast %73 : vector<8x1xf32> to vector<1x8x1xf32>
    tpu.vector_store %arg13[%c1_43, %c0_44, %c0_45], %76 {strides = array<i32>} : memref<4x8x1xf32, #tpu.memory_space<vmem>>, vector<1x8x1xf32>,
    %c1_46 = arith.constant 1 : index
    %c0_47 = arith.constant 0 : index
    %c0_48 = arith.constant 0 : index
    %77 = vector.load %arg12[%c1_46, %c0_47, %c0_48] : memref<4x8x1xf32, #tpu.memory_space<vmem>>, vector<1x8x1xf32>
    %78 = vector.shape_cast %77 : vector<1x8x1xf32> to vector<8x1xf32>
    %79 = vector.shape_cast %62 : vector<8x1xf32> to vector<1x8x1xf32>
    tpu.vector_store %arg12[%c1_46, %c0_47, %c0_48], %79 {strides = array<i32>} : memref<4x8x1xf32, #tpu.memory_space<vmem>>, vector<1x8x1xf32>,
    %80 = arith.truncf %67 : vector<8x8xf32> to vector<8x8xbf16>
    %81 = vector.extract_strided_slice %20 {offsets = [0, 32], sizes = [8, 32], strides = [1, 1]} : vector<8x128xbf16> to vector<8x32xbf16>
    %cst_49 = arith.constant dense<0.000000e+00> : vector<8x32xf32>
    %82 = tpu.matmul %80, %81, %cst_49 {dimension_numbers = #tpu.dot_dimension_numbers<[1], [0], [0], [1], [0, 0, 1, 1], [], []>} : vector<8x8xbf16>, vector<8x32xbf16>, vector<8x32xf32> -> vector<8x32xf32>
    %c0_50 = arith.constant 0 : index
    %c32 = arith.constant 32 : index
    %83 = vector.load %arg14[%c0_50, %c32] : memref<8x128xf32, #tpu.memory_space<vmem>>, vector<8x32xf32>
    %84 = vector.broadcast %64 : vector<8x1xf32> to vector<8x32xf32>
    %85 = arith.mulf %84, %83 : vector<8x32xf32>
    %86 = arith.addf %85, %82 : vector<8x32xf32>
    %c0_51 = arith.constant 0 : index
    %c32_52 = arith.constant 32 : index
    %87 = vector.load %arg14[%c0_51, %c32_52] : memref<8x128xf32, #tpu.memory_space<vmem>>, vector<8x32xf32>
    tpu.vector_store %arg14[%c0_51, %c32_52], %86 {strides = array<i32>} : memref<8x128xf32, #tpu.memory_space<vmem>>, vector<8x32xf32>,
    %88 = vector.extract_strided_slice %21 {offsets = [0, 64], sizes = [8, 32], strides = [1, 1]} : vector<8x128xbf16> to vector<8x32xbf16>
    %89 = vector.extract_strided_slice %11 {offsets = [0, 64], sizes = [8, 32], strides = [1, 1]} : vector<8x128xbf16> to vector<8x32xbf16>
    %cst_53 = arith.constant dense<0.000000e+00> : vector<8x8xf32>
    %90 = tpu.matmul %88, %89, %cst_53 {dimension_numbers = #tpu.dot_dimension_numbers<[1], [1], [0], [0], [0, 0, 1, 0], [], []>} : vector<8x32xbf16>, vector<8x32xbf16>, vector<8x8xf32> -> vector<8x8xf32>
    %c2 = arith.constant 2 : index
    %c0_54 = arith.constant 0 : index
    %c0_55 = arith.constant 0 : index
    %91 = vector.load %arg12[%c2, %c0_54, %c0_55] : memref<4x8x1xf32, #tpu.memory_space<vmem>>, vector<1x8x1xf32>
    %92 = vector.shape_cast %91 : vector<1x8x1xf32> to vector<8x1xf32>
    %cst_56 = arith.constant dense<0xFF800000> : vector<8xf32>
    %93 = vector.multi_reduction <maximumf>, %90, %cst_56 [1] : vector<8x8xf32> to vector<8xf32>
    %94 = vector.shape_cast %93 : vector<8xf32> to vector<8x1xf32>
    %95 = arith.maximumf %92, %94 : vector<8x1xf32>
    %96 = arith.subf %92, %95 : vector<8x1xf32>
    %97 = math.exp %96 : vector<8x1xf32>
    %98 = vector.broadcast %95 : vector<8x1xf32> to vector<8x8xf32>
    %99 = arith.subf %90, %98 : vector<8x8xf32>
    %100 = math.exp %99 : vector<8x8xf32>
    %c2_57 = arith.constant 2 : index
    %c0_58 = arith.constant 0 : index
    %c0_59 = arith.constant 0 : index
    %101 = vector.load %arg13[%c2_57, %c0_58, %c0_59] : memref<4x8x1xf32, #tpu.memory_space<vmem>>, vector<1x8x1xf32>
    %102 = vector.shape_cast %101 : vector<1x8x1xf32> to vector<8x1xf32>
    %103 = arith.mulf %97, %102 : vector<8x1xf32>
    %cst_60 = arith.constant dense<0.000000e+00> : vector<8xf32>
    %104 = vector.multi_reduction <add>, %100, %cst_60 [1] : vector<8x8xf32> to vector<8xf32>
    %105 = vector.shape_cast %104 : vector<8xf32> to vector<8x1xf32>
    %106 = arith.addf %103, %105 : vector<8x1xf32>
    %c2_61 = arith.constant 2 : index
    %c0_62 = arith.constant 0 : index
    %c0_63 = arith.constant 0 : index
    %107 = vector.load %arg13[%c2_61, %c0_62, %c0_63] : memref<4x8x1xf32, #tpu.memory_space<vmem>>, vector<1x8x1xf32>
    %108 = vector.shape_cast %107 : vector<1x8x1xf32> to vector<8x1xf32>
    %109 = vector.shape_cast %106 : vector<8x1xf32> to vector<1x8x1xf32>
    tpu.vector_store %arg13[%c2_61, %c0_62, %c0_63], %109 {strides = array<i32>} : memref<4x8x1xf32, #tpu.memory_space<vmem>>, vector<1x8x1xf32>,
    %c2_64 = arith.constant 2 : index
    %c0_65 = arith.constant 0 : index
    %c0_66 = arith.constant 0 : index
    %110 = vector.load %arg12[%c2_64, %c0_65, %c0_66] : memref<4x8x1xf32, #tpu.memory_space<vmem>>, vector<1x8x1xf32>
    %111 = vector.shape_cast %110 : vector<1x8x1xf32> to vector<8x1xf32>
    %112 = vector.shape_cast %95 : vector<8x1xf32> to vector<1x8x1xf32>
    tpu.vector_store %arg12[%c2_64, %c0_65, %c0_66], %112 {strides = array<i32>} : memref<4x8x1xf32, #tpu.memory_space<vmem>>, vector<1x8x1xf32>,
    %113 = arith.truncf %100 : vector<8x8xf32> to vector<8x8xbf16>
    %114 = vector.extract_strided_slice %20 {offsets = [0, 64], sizes = [8, 32], strides = [1, 1]} : vector<8x128xbf16> to vector<8x32xbf16>
    %cst_67 = arith.constant dense<0.000000e+00> : vector<8x32xf32>
    %115 = tpu.matmul %113, %114, %cst_67 {dimension_numbers = #tpu.dot_dimension_numbers<[1], [0], [0], [1], [0, 0, 1, 1], [], []>} : vector<8x8xbf16>, vector<8x32xbf16>, vector<8x32xf32> -> vector<8x32xf32>
    %c0_68 = arith.constant 0 : index
    %c64 = arith.constant 64 : index
    %116 = vector.load %arg14[%c0_68, %c64] : memref<8x128xf32, #tpu.memory_space<vmem>>, vector<8x32xf32>
    %117 = vector.broadcast %97 : vector<8x1xf32> to vector<8x32xf32>
    %118 = arith.mulf %117, %116 : vector<8x32xf32>
    %119 = arith.addf %118, %115 : vector<8x32xf32>
    %c0_69 = arith.constant 0 : index
    %c64_70 = arith.constant 64 : index
    %120 = vector.load %arg14[%c0_69, %c64_70] : memref<8x128xf32, #tpu.memory_space<vmem>>, vector<8x32xf32>
    tpu.vector_store %arg14[%c0_69, %c64_70], %119 {strides = array<i32>} : memref<8x128xf32, #tpu.memory_space<vmem>>, vector<8x32xf32>,
    %121 = vector.extract_strided_slice %21 {offsets = [0, 96], sizes = [8, 32], strides = [1, 1]} : vector<8x128xbf16> to vector<8x32xbf16>
    %122 = vector.extract_strided_slice %11 {offsets = [0, 96], sizes = [8, 32], strides = [1, 1]} : vector<8x128xbf16> to vector<8x32xbf16>
    %cst_71 = arith.constant dense<0.000000e+00> : vector<8x8xf32>
    %123 = tpu.matmul %121, %122, %cst_71 {dimension_numbers = #tpu.dot_dimension_numbers<[1], [1], [0], [0], [0, 0, 1, 0], [], []>} : vector<8x32xbf16>, vector<8x32xbf16>, vector<8x8xf32> -> vector<8x8xf32>
    %c3 = arith.constant 3 : index
    %c0_72 = arith.constant 0 : index
    %c0_73 = arith.constant 0 : index
    %124 = vector.load %arg12[%c3, %c0_72, %c0_73] : memref<4x8x1xf32, #tpu.memory_space<vmem>>, vector<1x8x1xf32>
    %125 = vector.shape_cast %124 : vector<1x8x1xf32> to vector<8x1xf32>
    %cst_74 = arith.constant dense<0xFF800000> : vector<8xf32>
    %126 = vector.multi_reduction <maximumf>, %123, %cst_74 [1] : vector<8x8xf32> to vector<8xf32>
    %127 = vector.shape_cast %126 : vector<8xf32> to vector<8x1xf32>
    %128 = arith.maximumf %125, %127 : vector<8x1xf32>
    %129 = arith.subf %125, %128 : vector<8x1xf32>
    %130 = math.exp %129 : vector<8x1xf32>
    %131 = vector.broadcast %128 : vector<8x1xf32> to vector<8x8xf32>
    %132 = arith.subf %123, %131 : vector<8x8xf32>
    %133 = math.exp %132 : vector<8x8xf32>
    %c3_75 = arith.constant 3 : index
    %c0_76 = arith.constant 0 : index
    %c0_77 = arith.constant 0 : index
    %134 = vector.load %arg13[%c3_75, %c0_76, %c0_77] : memref<4x8x1xf32, #tpu.memory_space<vmem>>, vector<1x8x1xf32>
    %135 = vector.shape_cast %134 : vector<1x8x1xf32> to vector<8x1xf32>
    %136 = arith.mulf %130, %135 : vector<8x1xf32>
    %cst_78 = arith.constant dense<0.000000e+00> : vector<8xf32>
    %137 = vector.multi_reduction <add>, %133, %cst_78 [1] : vector<8x8xf32> to vector<8xf32>
    %138 = vector.shape_cast %137 : vector<8xf32> to vector<8x1xf32>
    %139 = arith.addf %136, %138 : vector<8x1xf32>
    %c3_79 = arith.constant 3 : index
    %c0_80 = arith.constant 0 : index
    %c0_81 = arith.constant 0 : index
    %140 = vector.load %arg13[%c3_79, %c0_80, %c0_81] : memref<4x8x1xf32, #tpu.memory_space<vmem>>, vector<1x8x1xf32>
    %141 = vector.shape_cast %140 : vector<1x8x1xf32> to vector<8x1xf32>
    %142 = vector.shape_cast %139 : vector<8x1xf32> to vector<1x8x1xf32>
    tpu.vector_store %arg13[%c3_79, %c0_80, %c0_81], %142 {strides = array<i32>} : memref<4x8x1xf32, #tpu.memory_space<vmem>>, vector<1x8x1xf32>,
    %c3_82 = arith.constant 3 : index
    %c0_83 = arith.constant 0 : index
    %c0_84 = arith.constant 0 : index
    %143 = vector.load %arg12[%c3_82, %c0_83, %c0_84] : memref<4x8x1xf32, #tpu.memory_space<vmem>>, vector<1x8x1xf32>
    %144 = vector.shape_cast %143 : vector<1x8x1xf32> to vector<8x1xf32>
    %145 = vector.shape_cast %128 : vector<8x1xf32> to vector<1x8x1xf32>
    tpu.vector_store %arg12[%c3_82, %c0_83, %c0_84], %145 {strides = array<i32>} : memref<4x8x1xf32, #tpu.memory_space<vmem>>, vector<1x8x1xf32>,
    %146 = arith.truncf %133 : vector<8x8xf32> to vector<8x8xbf16>
    %147 = vector.extract_strided_slice %20 {offsets = [0, 96], sizes = [8, 32], strides = [1, 1]} : vector<8x128xbf16> to vector<8x32xbf16>
    %cst_85 = arith.constant dense<0.000000e+00> : vector<8x32xf32>
    %148 = tpu.matmul %146, %147, %cst_85 {dimension_numbers = #tpu.dot_dimension_numbers<[1], [0], [0], [1], [0, 0, 1, 1], [], []>} : vector<8x8xbf16>, vector<8x32xbf16>, vector<8x32xf32> -> vector<8x32xf32>
    %c0_86 = arith.constant 0 : index
    %c96 = arith.constant 96 : index
    %149 = vector.load %arg14[%c0_86, %c96] : memref<8x128xf32, #tpu.memory_space<vmem>>, vector<8x32xf32>
    %150 = vector.broadcast %130 : vector<8x1xf32> to vector<8x32xf32>
    %151 = arith.mulf %150, %149 : vector<8x32xf32>
    %152 = arith.addf %151, %148 : vector<8x32xf32>
    %c0_87 = arith.constant 0 : index
    %c96_88 = arith.constant 96 : index
    %153 = vector.load %arg14[%c0_87, %c96_88] : memref<8x128xf32, #tpu.memory_space<vmem>>, vector<8x32xf32>
    tpu.vector_store %arg14[%c0_87, %c96_88], %152 {strides = array<i32>} : memref<8x128xf32, #tpu.memory_space<vmem>>, vector<8x32xf32>,
    %c0_i32_89 = arith.constant 0 : i32
    %154 = arith.cmpi eq, %arg2, %c0_i32_89 : i32
    %155 = arith.extui %154 : i1 to i32
    %c0_i32_90 = arith.constant 0 : i32
    %156 = arith.cmpi ne, %155, %c0_i32_90 : i32
    scf.if %156 {
      %c0_91 = arith.constant 0 : index
      %c0_92 = arith.constant 0 : index
      %c0_93 = arith.constant 0 : index
      %157 = vector.load %arg13[%c0_91, %c0_92, %c0_93] : memref<4x8x1xf32, #tpu.memory_space<vmem>>, vector<1x8x1xf32>
      %158 = vector.shape_cast %157 : vector<1x8x1xf32> to vector<8x1xf32>
      %159 = tpu.reciprocal %158 {approx = true} : vector<8x1xf32> -> vector<8x1xf32>
      %c0_94 = arith.constant 0 : index
      %c0_95 = arith.constant 0 : index
      %160 = vector.load %arg14[%c0_94, %c0_95] : memref<8x128xf32, #tpu.memory_space<vmem>>, vector<8x32xf32>
      %161 = vector.broadcast %159 : vector<8x1xf32> to vector<8x32xf32>
      %162 = arith.mulf %160, %161 : vector<8x32xf32>
      %c0_96 = arith.constant 0 : index
      %c0_97 = arith.constant 0 : index
      %163 = vector.load %arg14[%c0_96, %c0_97] : memref<8x128xf32, #tpu.memory_space<vmem>>, vector<8x32xf32>
      tpu.vector_store %arg14[%c0_96, %c0_97], %162 {strides = array<i32>} : memref<8x128xf32, #tpu.memory_space<vmem>>, vector<8x32xf32>,
      %c1_98 = arith.constant 1 : index
      %c0_99 = arith.constant 0 : index
      %c0_100 = arith.constant 0 : index
      %164 = vector.load %arg13[%c1_98, %c0_99, %c0_100] : memref<4x8x1xf32, #tpu.memory_space<vmem>>, vector<1x8x1xf32>
      %165 = vector.shape_cast %164 : vector<1x8x1xf32> to vector<8x1xf32>
      %166 = tpu.reciprocal %165 {approx = true} : vector<8x1xf32> -> vector<8x1xf32>
      %c0_101 = arith.constant 0 : index
      %c32_102 = arith.constant 32 : index
      %167 = vector.load %arg14[%c0_101, %c32_102] : memref<8x128xf32, #tpu.memory_space<vmem>>, vector<8x32xf32>
      %168 = vector.broadcast %166 : vector<8x1xf32> to vector<8x32xf32>
      %169 = arith.mulf %167, %168 : vector<8x32xf32>
      %c0_103 = arith.constant 0 : index
      %c32_104 = arith.constant 32 : index
      %170 = vector.load %arg14[%c0_103, %c32_104] : memref<8x128xf32, #tpu.memory_space<vmem>>, vector<8x32xf32>
      tpu.vector_store %arg14[%c0_103, %c32_104], %169 {strides = array<i32>} : memref<8x128xf32, #tpu.memory_space<vmem>>, vector<8x32xf32>,
      %c2_105 = arith.constant 2 : index
      %c0_106 = arith.constant 0 : index
      %c0_107 = arith.constant 0 : index
      %171 = vector.load %arg13[%c2_105, %c0_106, %c0_107] : memref<4x8x1xf32, #tpu.memory_space<vmem>>, vector<1x8x1xf32>
      %172 = vector.shape_cast %171 : vector<1x8x1xf32> to vector<8x1xf32>
      %173 = tpu.reciprocal %172 {approx = true} : vector<8x1xf32> -> vector<8x1xf32>
      %c0_108 = arith.constant 0 : index
      %c64_109 = arith.constant 64 : index
      %174 = vector.load %arg14[%c0_108, %c64_109] : memref<8x128xf32, #tpu.memory_space<vmem>>, vector<8x32xf32>
      %175 = vector.broadcast %173 : vector<8x1xf32> to vector<8x32xf32>
      %176 = arith.mulf %174, %175 : vector<8x32xf32>
      %c0_110 = arith.constant 0 : index
      %c64_111 = arith.constant 64 : index
      %177 = vector.load %arg14[%c0_110, %c64_111] : memref<8x128xf32, #tpu.memory_space<vmem>>, vector<8x32xf32>
      tpu.vector_store %arg14[%c0_110, %c64_111], %176 {strides = array<i32>} : memref<8x128xf32, #tpu.memory_space<vmem>>, vector<8x32xf32>,
      %c3_112 = arith.constant 3 : index
      %c0_113 = arith.constant 0 : index
      %c0_114 = arith.constant 0 : index
      %178 = vector.load %arg13[%c3_112, %c0_113, %c0_114] : memref<4x8x1xf32, #tpu.memory_space<vmem>>, vector<1x8x1xf32>
      %179 = vector.shape_cast %178 : vector<1x8x1xf32> to vector<8x1xf32>
      %180 = tpu.reciprocal %179 {approx = true} : vector<8x1xf32> -> vector<8x1xf32>
      %c0_115 = arith.constant 0 : index
      %c96_116 = arith.constant 96 : index
      %181 = vector.load %arg14[%c0_115, %c96_116] : memref<8x128xf32, #tpu.memory_space<vmem>>, vector<8x32xf32>
      %182 = vector.broadcast %180 : vector<8x1xf32> to vector<8x32xf32>
      %183 = arith.mulf %181, %182 : vector<8x32xf32>
      %c0_117 = arith.constant 0 : index
      %c96_118 = arith.constant 96 : index
      %184 = vector.load %arg14[%c0_117, %c96_118] : memref<8x128xf32, #tpu.memory_space<vmem>>, vector<8x32xf32>
      tpu.vector_store %arg14[%c0_117, %c96_118], %183 {strides = array<i32>} : memref<8x128xf32, #tpu.memory_space<vmem>>, vector<8x32xf32>,
      %c0_119 = arith.constant 0 : index
      %c0_120 = arith.constant 0 : index
      %185 = vector.load %arg14[%c0_119, %c0_120] : memref<8x128xf32, #tpu.memory_space<vmem>>, vector<8x128xf32>
      %186 = arith.truncf %185 : vector<8x128xf32> to vector<8x128xbf16>
      %c0_121 = arith.constant 0 : index
      %c0_122 = arith.constant 0 : index
      %187 = vector.load %arg8[%c0_121, %c0_122] : memref<128x128xbf16, #tpu.memory_space<vmem>>, vector<128x128xbf16>
      %cst_123 = arith.constant dense<0.000000e+00> : vector<8x128xf32>
      %188 = tpu.matmul %186, %187, %cst_123 {dimension_numbers = #tpu.dot_dimension_numbers<[1], [0], [0], [1], [0, 0, 1, 1], [], []>} : vector<8x128xbf16>, vector<128x128xbf16>, vector<8x128xf32> -> vector<8x128xf32>
      %c0_124 = arith.constant 0 : index
      %c0_125 = arith.constant 0 : index
      %189 = vector.load %arg9[%c0_124, %c0_125] : memref<1x128xf32, #tpu.memory_space<vmem>>, vector<1x128xf32>
      %190 = vector.broadcast %189 : vector<1x128xf32> to vector<8x128xf32>
      %191 = arith.addf %188, %190 : vector<8x128xf32>
      %c0_126 = arith.constant 0 : index
      %c0_127 = arith.constant 0 : index
      %c0_128 = arith.constant 0 : index
      %192 = vector.load %arg10[%c0_126, %c0_127, %c0_128] : memref<1x8x128xf32, #tpu.memory_space<vmem>>, vector<1x8x128xf32>
      %193 = vector.shape_cast %192 : vector<1x8x128xf32> to vector<8x128xf32>
      %194 = vector.shape_cast %191 : vector<8x128xf32> to vector<1x8x128xf32>
      tpu.vector_store %arg10[%c0_126, %c0_127, %c0_128], %194 {strides = array<i32>} : memref<1x8x128xf32, #tpu.memory_space<vmem>>, vector<1x8x128xf32>,
    } else {
    }
    return
  }
  func.func @transform_0(%arg0: i32, %arg1: i32, %arg2: i32) -> (i32, i32, i32) {
    %c0_i32 = arith.constant 0 : i32
    %c0_i32_0 = arith.constant 0 : i32
    return %arg0, %arg1, %c0_i32 : i32, i32, i32
  }
  func.func @transform_1(%arg0: i32, %arg1: i32, %arg2: i32) -> (i32, i32, i32) {
    %c0_i32 = arith.constant 0 : i32
    %c0_i32_0 = arith.constant 0 : i32
    return %arg0, %arg2, %c0_i32 : i32, i32, i32
  }
  func.func @transform_2(%arg0: i32, %arg1: i32, %arg2: i32) -> (i32, i32, i32) {
    %c0_i32 = arith.constant 0 : i32
    %c0_i32_0 = arith.constant 0 : i32
    return %arg0, %arg2, %c0_i32 : i32, i32, i32
  }
  func.func @transform_3(%arg0: i32, %arg1: i32, %arg2: i32) -> (i32, i32) {
    %c0_i32 = arith.constant 0 : i32
    %c0_i32_0 = arith.constant 0 : i32
    %c0_i32_1 = arith.constant 0 : i32
    return %c0_i32, %c0_i32_0 : i32, i32
  }
  func.func @transform_4(%arg0: i32, %arg1: i32, %arg2: i32) -> (i32, i32) {
    %c0_i32 = arith.constant 0 : i32
    %c0_i32_0 = arith.constant 0 : i32
    %c0_i32_1 = arith.constant 0 : i32
    return %c0_i32, %c0_i32_0 : i32, i32
  }
  func.func @transform_5(%arg0: i32, %arg1: i32, %arg2: i32) -> (i32, i32) {
    %c0_i32 = arith.constant 0 : i32
    %c0_i32_0 = arith.constant 0 : i32
    %c0_i32_1 = arith.constant 0 : i32
    return %c0_i32, %c0_i32_0 : i32, i32
  }
  func.func @transform_6(%arg0: i32, %arg1: i32, %arg2: i32) -> (i32, i32) {
    %c0_i32 = arith.constant 0 : i32
    %c0_i32_0 = arith.constant 0 : i32
    %c0_i32_1 = arith.constant 0 : i32
    return %c0_i32, %c0_i32_0 : i32, i32
  }
  func.func @transform_7(%arg0: i32, %arg1: i32, %arg2: i32) -> (i32, i32, i32) {
    %c0_i32 = arith.constant 0 : i32
    %c0_i32_0 = arith.constant 0 : i32
    return %arg0, %arg1, %c0_i32 : i32, i32, i32
  }
}

</mosaic_0001>

<llo_original>
// kernel: tpu_custom_call.1
$region0: #{tpu_custom_call.1}
  #allocation0 [shape = 'u32[]', space=smem, size = 0x4, offset = 0x4, fixed_abs, tag = 'smem constant byte address 0x4 - core index']
  #allocation1 [shape = 'u32[144,128]{1,0:T(1,128)}', space=vmem, size = 0x12000, scoped, tag = 'internal scratch']
  #allocation2 [shape = 'bf16[8,128]{1,0:T(8,128)(2,1)}', space=vmem, size = 0x800, scoped, tag = 'scratch operand']
  #allocation3 [shape = 'f32[4,8,1]{2,1,0:T(8,128)}', space=vmem, size = 0x4000, scoped, tag = 'scratch operand']
  #allocation4 [shape = 'f32[4,8,1]{2,1,0:T(8,128)}', space=vmem, size = 0x4000, scoped, tag = 'scratch operand']
  #allocation5 [shape = 'f32[8,128]{1,0:T(8,128)}', space=vmem, size = 0x1000, scoped, tag = 'scratch operand']
  %s0 = inlined_call_operand.hbm [shape: f32[2,8,128], index: 0, kind: input, shape index: {}]
  %s1 = inlined_call_operand.hbm [shape: f32[2,8,128], index: 1, kind: input, shape index: {}]
  %s2 = inlined_call_operand.hbm [shape: f32[2,8,128], index: 2, kind: input, shape index: {}]
  %s3 = inlined_call_operand.hbm [shape: bf16[128,384], index: 3, kind: input, shape index: {}]
  %s4 = inlined_call_operand.vmem [shape: f32[1,384], index: 4, kind: input, shape index: {}]
  %s5 = inlined_call_operand.hbm [shape: bf16[128,128], index: 5, kind: input, shape index: {}]
  %s6 = inlined_call_operand.vmem [shape: f32[1,128], index: 6, kind: input, shape index: {}]
  %s7 = inlined_call_operand.hbm [shape: f32[2,8,128], index: 7, kind: output, shape index: {}]
  %s8 = sld [smem:[#allocation0]]
  $region89: #{tpu_custom_call.1} parent=0
    _
  %s10 = ssub.s32 1, %s8
  %s11 = scalar_select 0, %s10, %s8
  $region1: #{tpu_custom_call.1} parent=0
    #allocation6 [shape = 'u8[8192]{0}', space=vmem, size = 0x2000, scoped, tag = 'input window, operand 0']
    #allocation7 [shape = 's32[2]{0}', space=sflag, size = 0x8, scoped, tag = 'scoped memory for tpu_custom_call.1']
    #allocation8 [shape = 's32[2]{0}', space=sflag, size = 0x8, scoped, tag = 'scoped memory for tpu_custom_call.1']
    #allocation9 [shape = 'u8[8192]{0}', space=vmem, size = 0x2000, scoped, tag = 'input window, operand 1']
    #allocation10 [shape = 's32[2]{0}', space=sflag, size = 0x8, scoped, tag = 'scoped memory for tpu_custom_call.1']
    #allocation11 [shape = 'u8[8192]{0}', space=vmem, size = 0x2000, scoped, tag = 'input window, operand 2']
    #allocation12 [shape = 'u8[98304]{0}', space=vmem, size = 0x18000, scoped, tag = 'input window, operand 3, single buffered']
    #allocation13 [shape = 's32[1]{0}', space=sflag, size = 0x4, scoped, tag = 'scoped memory for tpu_custom_call.1']
    #allocation14 [shape = 'u8[32768]{0}', space=vmem, size = 0x8000, scoped, tag = 'input window, operand 5, single buffered']
    #allocation15 [shape = 'u8[8192]{0}', space=vmem, size = 0x2000, scoped, tag = 'output window, operand 0']
    %12 = vsyncpa [#allocation7], 0
    %s13 = scalar_lea.sflag [#allocation7], 1
    %14 = vsyncpa %s13, 0
    %15 = vsyncpa [#allocation10], 0
    %s16 = scalar_lea.sflag [#allocation10], 1
    %17 = vsyncpa %s16, 0
    %18 = vsyncpa [#allocation13], 0
    %19 = vsyncpa [#allocation8], 0
    %s20 = scalar_lea.sflag [#allocation8], 1
    %21 = vsyncpa %s20, 0
    loop: start=0, step=1, limit=4
    $region2: #{tpu_custom_call.1} parent=1 // loop_pre_header
      _
    $region3: #{tpu_custom_call.1} parent=1 // loop_header
      %s23 = sphi 0, %s27
      %p24 = scmp.ge.s32.totalorder %s23, 4
      %s30 = sphi 0, %s49
      %s31 = sphi 0, %s45
      %s32 = sphi 0, %s41
      %s33 = sphi 0, %s30
      %s34 = sphi 0, %s31
      %s35 = sphi 0, %s32
      %s36 = sphi 0, %s33
      %s37 = sphi 0, %s34
      %s38 = sphi 0, %s35
      %s54 = sphi 0, %s56
      %s57 = sphi 0, %s54
      %s58 = sphi 0, %s57
      %s74 = sphi 0, %s58
      %s82 = sphi 0, %s84
      %s85 = sphi 0, %s82
      %s86 = sphi 0, %s85
      %s102 = sphi 0, %s86
      %s110 = sphi 0, %s112
      %s113 = sphi 0, %s110
      %s114 = sphi 0, %s113
      %s130 = sphi 0, %s114
      %s134 = sphi 0, %s134
      %s136 = sphi 0, %s134
      %s137 = sphi 0, %s136
      %s151 = sphi 0, %s137
      %s155 = sphi 0, %s155
      %s157 = sphi 0, %s155
      %s158 = sphi 0, %s157
      %s172 = sphi 0, %s158
      %s176 = sphi 0, %s176
      %s178 = sphi 0, %s176
      %s179 = sphi 0, %s178
      %s193 = sphi 0, %s179
      %s197 = sphi 0, %s197
      %s199 = sphi 0, %s197
      %s200 = sphi 0, %s199
      %s214 = sphi 0, %s200
      %s222 = sphi 0, %s224
      %s225 = sphi 0, %s222
      %s226 = sphi 0, %s225
      %s242 = sphi 0, %s226
    $region4: #{tpu_custom_call.1} parent=1 // loop_header_branch
      %26 = sbr.rel (%p24) target = $region8
    $region5: #{tpu_custom_call.1} parent=1 // loop_body
      %s28 = ssub.s32 %s23, 1
      %s29 = ssub.s32 %s23, 2
      %s39 = sadd.s32 1, %s32
      %p40 = scmp.ge.s32.totalorder %s39, 1
      %s41 = scalar_select %p40, 0, %s39
      %s42 = sadd.s32 1, %s31
      %s43 = scalar_select %p40, %s42, %s31
      %p44 = scmp.ge.s32.totalorder %s43, 1
      %s45 = scalar_select %p44, 0, %s43
      %s46 = sadd.s32 1, %s30
      %s47 = scalar_select %p44, %s46, %s30
      %p48 = scmp.ge.s32.totalorder %s47, 2
      %s49 = scalar_select %p48, 0, %s47
      %s50 = ssub.s32 %s30, %s49
      %s51 = ssub.s32 %s31, %s45
      %s52 = sor.u32 %s50, %s51
      %p53 = scmp.eq.s32.totalorder %s52, 0
      %s55 = sadd.s32 %s54, 1
      %s56 = scalar_select %p53, %s54, %s55
      %p59 = pneg %p53
      %p60 = scmp.eq.s32.totalorder %s23, 1
      %p61 = por %p59, %p60
      %p62 = scmp.ne.s32.totalorder %s54, %s57
      %p63 = scmp.eq.s32.totalorder %s23, 0
      %p64 = por %p62, %p63
      %p65 = scmp.ne.s32.totalorder %s54, %s57
      %p66 = scmp.eq.s32.totalorder %s28, 1
      %p67 = por %p65, %p66
      %p68 = scmp.ne.s32.totalorder %s57, %s58
      %p69 = scmp.eq.s32.totalorder %s28, 0
      %p70 = por %p68, %p69
      %p71 = scmp.ne.s32.totalorder %s57, %s58
      %p72 = scmp.eq.s32.totalorder %s29, 1
      %p73 = por %p71, %p72
      %p75 = scmp.ne.s32.totalorder %s58, %s74
      %p76 = scmp.eq.s32.totalorder %s29, 0
      %p77 = por %p75, %p76
      %s78 = ssub.s32 %s30, %s49
      %s79 = ssub.s32 %s32, %s41
      %s80 = sor.u32 %s78, %s79
      %p81 = scmp.eq.s32.totalorder %s80, 0
      %s83 = sadd.s32 %s82, 1
      %s84 = scalar_select %p81, %s82, %s83
      %p87 = pneg %p81
      %p88 = scmp.eq.s32.totalorder %s23, 1
      %p89 = por %p87, %p88
      %p90 = scmp.ne.s32.totalorder %s82, %s85
      %p91 = scmp.eq.s32.totalorder %s23, 0
      %p92 = por %p90, %p91
      %p93 = scmp.ne.s32.totalorder %s82, %s85
      %p94 = scmp.eq.s32.totalorder %s28, 1
      %p95 = por %p93, %p94
      %p96 = scmp.ne.s32.totalorder %s85, %s86
      %p97 = scmp.eq.s32.totalorder %s28, 0
      %p98 = por %p96, %p97
      %p99 = scmp.ne.s32.totalorder %s85, %s86
      %p100 = scmp.eq.s32.totalorder %s29, 1
      %p101 = por %p99, %p100
      %p103 = scmp.ne.s32.totalorder %s86, %s102
      %p104 = scmp.eq.s32.totalorder %s29, 0
      %p105 = por %p103, %p104
      %s106 = ssub.s32 %s30, %s49
      %s107 = ssub.s32 %s32, %s41
      %s108 = sor.u32 %s106, %s107
      %p109 = scmp.eq.s32.totalorder %s108, 0
      %s111 = sadd.s32 %s110, 1
      %s112 = scalar_select %p109, %s110, %s111
      %p115 = pneg %p109
      %p116 = scmp.eq.s32.totalorder %s23, 1
      %p117 = por %p115, %p116
      %p118 = scmp.ne.s32.totalorder %s110, %s113
      %p119 = scmp.eq.s32.totalorder %s23, 0
      %p120 = por %p118, %p119
      %p121 = scmp.ne.s32.totalorder %s110, %s113
      %p122 = scmp.eq.s32.totalorder %s28, 1
      %p123 = por %p121, %p122
      %p124 = scmp.ne.s32.totalorder %s113, %s114
      %p125 = scmp.eq.s32.totalorder %s28, 0
      %p126 = por %p124, %p125
      %p127 = scmp.ne.s32.totalorder %s113, %s114
      %p128 = scmp.eq.s32.totalorder %s29, 1
      %p129 = por %p127, %p128
      %p131 = scmp.ne.s32.totalorder %s114, %s130
      %p132 = scmp.eq.s32.totalorder %s29, 0
      %p133 = por %p131, %p132
      %s135 = sadd.s32 %s134, 1
      %p138 = scmp.eq.s32.totalorder %s23, 1
      %p139 = scmp.ne.s32.totalorder %s134, %s136
      %p140 = scmp.eq.s32.totalorder %s23, 0
      %p141 = por %p139, %p140
      %p142 = scmp.ne.s32.totalorder %s134, %s136
      %p143 = scmp.eq.s32.totalorder %s28, 1
      %p144 = por %p142, %p143
      %p145 = scmp.ne.s32.totalorder %s136, %s137
      %p146 = scmp.eq.s32.totalorder %s28, 0
      %p147 = por %p145, %p146
      %p148 = scmp.ne.s32.totalorder %s136, %s137
      %p149 = scmp.eq.s32.totalorder %s29, 1
      %p150 = por %p148, %p149
      %p152 = scmp.ne.s32.totalorder %s137, %s151
      %p153 = scmp.eq.s32.totalorder %s29, 0
      %p154 = por %p152, %p153
      %s156 = sadd.s32 %s155, 1
      %p159 = scmp.eq.s32.totalorder %s23, 1
      %p160 = scmp.ne.s32.totalorder %s155, %s157
      %p161 = scmp.eq.s32.totalorder %s23, 0
      %p162 = por %p160, %p161
      %p163 = scmp.ne.s32.totalorder %s155, %s157
      %p164 = scmp.eq.s32.totalorder %s28, 1
      %p165 = por %p163, %p164
      %p166 = scmp.ne.s32.totalorder %s157, %s158
      %p167 = scmp.eq.s32.totalorder %s28, 0
      %p168 = por %p166, %p167
      %p169 = scmp.ne.s32.totalorder %s157, %s158
      %p170 = scmp.eq.s32.totalorder %s29, 1
      %p171 = por %p169, %p170
      %p173 = scmp.ne.s32.totalorder %s158, %s172
      %p174 = scmp.eq.s32.totalorder %s29, 0
      %p175 = por %p173, %p174
      %s177 = sadd.s32 %s176, 1
      %p180 = scmp.eq.s32.totalorder %s23, 1
      %p181 = scmp.ne.s32.totalorder %s176, %s178
      %p182 = scmp.eq.s32.totalorder %s23, 0
      %p183 = por %p181, %p182
      %p184 = scmp.ne.s32.totalorder %s176, %s178
      %p185 = scmp.eq.s32.totalorder %s28, 1
      %p186 = por %p184, %p185
      %p187 = scmp.ne.s32.totalorder %s178, %s179
      %p188 = scmp.eq.s32.totalorder %s28, 0
      %p189 = por %p187, %p188
      %p190 = scmp.ne.s32.totalorder %s178, %s179
      %p191 = scmp.eq.s32.totalorder %s29, 1
      %p192 = por %p190, %p191
      %p194 = scmp.ne.s32.totalorder %s179, %s193
      %p195 = scmp.eq.s32.totalorder %s29, 0
      %p196 = por %p194, %p195
      %s198 = sadd.s32 %s197, 1
      %p201 = scmp.eq.s32.totalorder %s23, 1
      %p202 = scmp.ne.s32.totalorder %s197, %s199
      %p203 = scmp.eq.s32.totalorder %s23, 0
      %p204 = por %p202, %p203
      %p205 = scmp.ne.s32.totalorder %s197, %s199
      %p206 = scmp.eq.s32.totalorder %s28, 1
      %p207 = por %p205, %p206
      %p208 = scmp.ne.s32.totalorder %s199, %s200
      %p209 = scmp.eq.s32.totalorder %s28, 0
      %p210 = por %p208, %p209
      %p211 = scmp.ne.s32.totalorder %s199, %s200
      %p212 = scmp.eq.s32.totalorder %s29, 1
      %p213 = por %p211, %p212
      %p215 = scmp.ne.s32.totalorder %s200, %s214
      %p216 = scmp.eq.s32.totalorder %s29, 0
      %p217 = por %p215, %p216
      %s218 = ssub.s32 %s30, %s49
      %s219 = ssub.s32 %s31, %s45
      %s220 = sor.u32 %s218, %s219
      %p221 = scmp.eq.s32.totalorder %s220, 0
      %s223 = sadd.s32 %s222, 1
      %s224 = scalar_select %p221, %s222, %s223
      %p227 = pneg %p221
      %p228 = scmp.eq.s32.totalorder %s23, 1
      %p229 = por %p227, %p228
      %p230 = scmp.ne.s32.totalorder %s222, %s225
      %p231 = scmp.eq.s32.totalorder %s23, 0
      %p232 = por %p230, %p231
      %p233 = scmp.ne.s32.totalorder %s222, %s225
      %p234 = scmp.eq.s32.totalorder %s28, 1
      %p235 = por %p233, %p234
      %p236 = scmp.ne.s32.totalorder %s225, %s226
      %p237 = scmp.eq.s32.totalorder %s28, 0
      %p238 = por %p236, %p237
      %p239 = scmp.ne.s32.totalorder %s225, %s226
      %p240 = scmp.eq.s32.totalorder %s29, 1
      %p241 = por %p239, %p240
      %p243 = scmp.ne.s32.totalorder %s226, %s242
      %p244 = scmp.eq.s32.totalorder %s29, 0
      %p245 = por %p243, %p244
      %p246 = scmp.le.s32.totalorder 1, %s23
      %p247 = scmp.lt.s32.totalorder %s23, 3
      %p248 = pnand %p246, %p247
      %p249 = pneg %p248
      // Predicated region
      $region9: #{tpu_custom_call.1} parent=5 // pred_check
        _
      $region10: #{tpu_custom_call.1} parent=5 // pred_check_branch
        %251 = sbr.rel (%p248) target = $region12
      $region11: #{tpu_custom_call.1} parent=5 // pred_region
        %s252 = ssub.s32 %s23, 1
        // Predicated region
        $region13: #{tpu_custom_call.1} parent=11 // pred_check
          %p253 = pneg %p147
        $region14: #{tpu_custom_call.1} parent=11 // pred_check_branch
          %255 = sbr.rel (%p253) target = $region16
        $region15: #{tpu_custom_call.1} parent=11 // pred_region
          %s257 = ssub.s32 3072, 3072
          %258 = vsyncadd [#allocation13], %s257
          %s259 = sshll.u32 [#allocation12], 4
          %s260 = int_to_ptr.vmem [resolvable:$true] %s259
          %265 = dma.hbm_to_vmem [thread:$0]  %s3, 3072, %s260, [#allocation13], 192, 192, 12
        $region16: #{tpu_custom_call.1} parent=11 // pred_fallthru
          _
        // Predicated region
        $region17: #{tpu_custom_call.1} parent=11 // pred_check
          %p266 = pneg %p168
        $region18: #{tpu_custom_call.1} parent=11 // pred_check_branch
          %268 = sbr.rel (%p266) target = $region20
        $region19: #{tpu_custom_call.1} parent=11 // pred_region
          _
        $region20: #{tpu_custom_call.1} parent=11 // pred_fallthru
          _
        // Predicated region
        $region21: #{tpu_custom_call.1} parent=11 // pred_check
          %p269 = pneg %p189
        $region22: #{tpu_custom_call.1} parent=11 // pred_check_branch
          %271 = sbr.rel (%p269) target = $region24
        $region23: #{tpu_custom_call.1} parent=11 // pred_region
          %s273 = ssub.s32 1024, 1024
          %274 = vsyncadd [#allocation13], %s273
          %s275 = sshll.u32 [#allocation14], 4
          %s276 = int_to_ptr.vmem [resolvable:$true] %s275
          %281 = dma.hbm_to_vmem [thread:$0]  %s5, 1024, %s276, [#allocation13], 64, 64, 4
        $region24: #{tpu_custom_call.1} parent=11 // pred_fallthru
          _
        // Predicated region
        $region25: #{tpu_custom_call.1} parent=11 // pred_check
          %p282 = pneg %p210
        $region26: #{tpu_custom_call.1} parent=11 // pred_check_branch
          %284 = sbr.rel (%p282) target = $region28
        $region27: #{tpu_custom_call.1} parent=11 // pred_region
          _
        $region28: #{tpu_custom_call.1} parent=11 // pred_fallthru
          _
      $region12: #{tpu_custom_call.1} parent=5 // pred_fallthru
        _
      %p285 = scmp.lt.s32.totalorder %s23, 2
      // Predicated region
      $region29: #{tpu_custom_call.1} parent=5 // pred_check
        %p286 = pneg %p285
      $region30: #{tpu_custom_call.1} parent=5 // pred_check_branch
        %288 = sbr.rel (%p286) target = $region32
      $region31: #{tpu_custom_call.1} parent=5 // pred_region
        // Predicated region
        $region33: #{tpu_custom_call.1} parent=31 // pred_check
          %p289 = pneg %p64
        $region34: #{tpu_custom_call.1} parent=31 // pred_check_branch
          %291 = sbr.rel (%p289) target = $region36
        $region35: #{tpu_custom_call.1} parent=31 // pred_region
          %s292 = sand.u32 %s54, 1
          %s293 = scalar_lea.sflag [#allocation7], %s292
          %s294 = sand.u32 %s54, 1
          %s295 = smul.addr %s294, 8
          %s296 = scalar_lea.vmem [#allocation6], %s295
          %s298 = ssub.s32 128, 128
          %299 = vsyncadd %s293, %s298
          %s300 = sadd.s32 %s31, %s30
          %s301 = smul.addr %s300, 128
          %s302 = scalar_lea.hbm %s0, %s301
          %s304 = sshll.u32 %s296, 4
          %s305 = int_to_ptr.vmem [resolvable:$true] %s304
          %307 = dma.hbm_to_vmem [thread:$0]  %s302, 128, %s305, %s293
        $region36: #{tpu_custom_call.1} parent=31 // pred_fallthru
          _
        // Predicated region
        $region37: #{tpu_custom_call.1} parent=31 // pred_check
          %p308 = pneg %p92
        $region38: #{tpu_custom_call.1} parent=31 // pred_check_branch
          %310 = sbr.rel (%p308) target = $region40
        $region39: #{tpu_custom_call.1} parent=31 // pred_region
          %s311 = sand.u32 %s23, 1
          %s312 = scalar_lea.sflag [#allocation10], %s311
          %s313 = sand.u32 %s82, 1
          %s314 = smul.addr %s313, 8
          %s315 = scalar_lea.vmem [#allocation9], %s314
          %s317 = ssub.s32 128, 128
          %318 = vsyncadd %s312, %s317
          %s319 = sadd.s32 %s32, %s30
          %s320 = smul.addr %s319, 128
          %s321 = scalar_lea.hbm %s1, %s320
          %s323 = sshll.u32 %s315, 4
          %s324 = int_to_ptr.vmem [resolvable:$true] %s323
          %326 = dma.hbm_to_vmem [thread:$0]  %s321, 128, %s324, %s312
        $region40: #{tpu_custom_call.1} parent=31 // pred_fallthru
          _
        // Predicated region
        $region41: #{tpu_custom_call.1} parent=31 // pred_check
          %p327 = pneg %p120
        $region42: #{tpu_custom_call.1} parent=31 // pred_check_branch
          %329 = sbr.rel (%p327) target = $region44
        $region43: #{tpu_custom_call.1} parent=31 // pred_region
          %s330 = sand.u32 %s23, 1
          %s331 = scalar_lea.sflag [#allocation10], %s330
          %s332 = sand.u32 %s110, 1
          %s333 = smul.addr %s332, 8
          %s334 = scalar_lea.vmem [#allocation11], %s333
          %s336 = ssub.s32 128, 128
          %337 = vsyncadd %s331, %s336
          %s338 = sadd.s32 %s32, %s30
          %s339 = smul.addr %s338, 128
          %s340 = scalar_lea.hbm %s2, %s339
          %s342 = sshll.u32 %s334, 4
          %s343 = int_to_ptr.vmem [resolvable:$true] %s342
          %345 = dma.hbm_to_vmem [thread:$0]  %s340, 128, %s343, %s331
        $region44: #{tpu_custom_call.1} parent=31 // pred_fallthru
          _
      $region32: #{tpu_custom_call.1} parent=5 // pred_fallthru
        _
      %p346 = scmp.le.s32.totalorder 1, %s23
      %p347 = scmp.lt.s32.totalorder %s23, 3
      %p348 = pnand %p346, %p347
      %p349 = pneg %p348
      // Predicated region
      $region45: #{tpu_custom_call.1} parent=5 // pred_check
        _
      $region46: #{tpu_custom_call.1} parent=5 // pred_check_branch
        %351 = sbr.rel (%p348) target = $region48
      $region47: #{tpu_custom_call.1} parent=5 // pred_region
        %s352 = ssub.s32 %s23, 1
        %s353 = sand.u32 %s57, 1
        %s354 = scalar_lea.sflag [#allocation7], %s353
        %s355 = sand.u32 %s57, 1
        %s356 = smul.addr %s355, 8
        %s357 = scalar_lea.vmem [#allocation6], %s356
        // Predicated region
        $region49: #{tpu_custom_call.1} parent=47 // pred_check
          %p358 = pneg %p70
        $region50: #{tpu_custom_call.1} parent=47 // pred_check_branch
          %360 = sbr.rel (%p358) target = $region52
        $region51: #{tpu_custom_call.1} parent=47 // pred_region
          %361 = dma.done %s354, 128
        $region52: #{tpu_custom_call.1} parent=47 // pred_fallthru
          _
        %s362 = sand.u32 %s28, 1
        %s363 = scalar_lea.sflag [#allocation10], %s362
        %s364 = sand.u32 %s85, 1
        %s365 = smul.addr %s364, 8
        %s366 = scalar_lea.vmem [#allocation9], %s365
        // Predicated region
        $region53: #{tpu_custom_call.1} parent=47 // pred_check
          %p367 = pneg %p98
        $region54: #{tpu_custom_call.1} parent=47 // pred_check_branch
          %369 = sbr.rel (%p367) target = $region56
        $region55: #{tpu_custom_call.1} parent=47 // pred_region
          %370 = dma.done %s363, 128
        $region56: #{tpu_custom_call.1} parent=47 // pred_fallthru
          _
        %s371 = sand.u32 %s28, 1
        %s372 = scalar_lea.sflag [#allocation10], %s371
        %s373 = sand.u32 %s113, 1
        %s374 = smul.addr %s373, 8
        %s375 = scalar_lea.vmem [#allocation11], %s374
        // Predicated region
        $region57: #{tpu_custom_call.1} parent=47 // pred_check
          %p376 = pneg %p126
        $region58: #{tpu_custom_call.1} parent=47 // pred_check_branch
          %378 = sbr.rel (%p376) target = $region60
        $region59: #{tpu_custom_call.1} parent=47 // pred_region
          %379 = dma.done %s372, 128
        $region60: #{tpu_custom_call.1} parent=47 // pred_fallthru
          _
        // Predicated region
        $region61: #{tpu_custom_call.1} parent=47 // pred_check
          %p380 = pneg %p147
        $region62: #{tpu_custom_call.1} parent=47 // pred_check_branch
          %382 = sbr.rel (%p380) target = $region64
        $region63: #{tpu_custom_call.1} parent=47 // pred_region
          %383 = dma.done [#allocation13], 3072
        $region64: #{tpu_custom_call.1} parent=47 // pred_fallthru
          _
        // Predicated region
        $region65: #{tpu_custom_call.1} parent=47 // pred_check
          %p384 = pneg %p189
        $region66: #{tpu_custom_call.1} parent=47 // pred_check_branch
          %386 = sbr.rel (%p384) target = $region68
        $region67: #{tpu_custom_call.1} parent=47 // pred_region
          %387 = dma.done [#allocation13], 1024
        $region68: #{tpu_custom_call.1} parent=47 // pred_fallthru
          _
        %s388 = sand.u32 %s57, 1
        %s389 = scalar_lea.sflag [#allocation7], %s388
        %s390 = sand.u32 %s57, 1
        %s391 = smul.addr %s390, 8
        %s392 = scalar_lea.vmem [#allocation6], %s391
        %p393 = pneg %p70
        %p394 = pneg %p67
        %s395 = sand.u32 %s28, 1
        %s396 = scalar_lea.sflag [#allocation10], %s395
        %s397 = sand.u32 %s85, 1
        %s398 = smul.addr %s397, 8
        %s399 = scalar_lea.vmem [#allocation9], %s398
        %p400 = pneg %p98
        %p401 = pneg %p95
        %s402 = sand.u32 %s28, 1
        %s403 = scalar_lea.sflag [#allocation10], %s402
        %s404 = sand.u32 %s113, 1
        %s405 = smul.addr %s404, 8
        %s406 = scalar_lea.vmem [#allocation11], %s405
        %p407 = pneg %p126
        %p408 = pneg %p123
        %p409 = pneg %p147
        %p410 = pneg %p144
        %p411 = pneg %p168
        %p412 = pneg %p165
        %p413 = pneg %p189
        %p414 = pneg %p186
        %p415 = pneg %p210
        %p416 = pneg %p207
        %p417 = pneg %p238
        %p418 = pneg %p235
        %s419 = sand.u32 %s225, 1
        %s420 = scalar_lea.sflag [#allocation8], %s419
        %s421 = sand.u32 %s225, 1
        %s422 = smul.addr %s421, 8
        %s423 = scalar_lea.vmem [#allocation15], %s422
        %p425 = scmp.eq.s32.totalorder %s35, 0
        // Predicated region
        $region69: #{tpu_custom_call.1} parent=47 // pred_check
          %p426 = pneg %p425
        $region70: #{tpu_custom_call.1} parent=47 // pred_check_branch
          %428 = sbr.rel (%p426) target = $region72
        $region71: #{tpu_custom_call.1} parent=47 // pred_region
          %v429 = vld [vmem:[%s357] sm:$0xff]
          %v430 = vpack.c.bf16 %v429, %v429
          %v431 = vld [vmem:[#allocation12] sm:$0xf]
          %v432 = vld [vmem:[#allocation12 + $0xc] sm:$0xf]
          %v433 = vld [vmem:[#allocation12 + $0x18] sm:$0xf]
          %v434 = vld [vmem:[#allocation12 + $0x24] sm:$0xf]
          %v435 = vld [vmem:[#allocation12 + $0x30] sm:$0xf]
          %v436 = vld [vmem:[#allocation12 + $0x3c] sm:$0xf]
          %v437 = vld [vmem:[#allocation12 + $0x48] sm:$0xf]
          %v438 = vld [vmem:[#allocation12 + $0x54] sm:$0xf]
          %v439 = vld [vmem:[#allocation12 + $0x60] sm:$0xf]
          %v440 = vld [vmem:[#allocation12 + $0x6c] sm:$0xf]
          %v441 = vld [vmem:[#allocation12 + $0x78] sm:$0xf]
          %v442 = vld [vmem:[#allocation12 + $0x84] sm:$0xf]
          %v443 = vld [vmem:[#allocation12 + $0x90] sm:$0xf]
          %v444 = vld [vmem:[#allocation12 + $0x9c] sm:$0xf]
          %v445 = vld [vmem:[#allocation12 + $0xa8] sm:$0xf]
          %v446 = vld [vmem:[#allocation12 + $0xb4] sm:$0xf]
          %v447 = vld [vmem:[%s4] sm:$0x1]
          %v449 = vlaneseq
          %v450 = vshrl.u32 %v449, 7
          %v451 = vsub.s32 0, %v450
          %v452 = vrot.slane %v447, %v451
          %v470 = vunpack.c.l.b16 %v431
          %v471 = vunpack.c.l.b16 %v432
          %v472 = vunpack.c.l.b16 %v433
          %v473 = vunpack.c.l.b16 %v434
          %v474 = vunpack.c.l.b16 %v435
          %v475 = vunpack.c.l.b16 %v436
          %v476 = vunpack.c.l.b16 %v437
          %v477 = vunpack.c.l.b16 %v438
          %v478 = vunpack.c.l.b16 %v439
          %v479 = vunpack.c.l.b16 %v440
          %v480 = vunpack.c.l.b16 %v441
          %v481 = vunpack.c.l.b16 %v442
          %v482 = vunpack.c.l.b16 %v443
          %v483 = vunpack.c.l.b16 %v444
          %v484 = vunpack.c.l.b16 %v445
          %v485 = vunpack.c.l.b16 %v446
          %v486 = vpack.c.b16 %v471, %v470
          %v487 = vpack.c.b16 %v473, %v472
          %v488 = vpack.c.b16 %v475, %v474
          %v489 = vpack.c.b16 %v477, %v476
          %v490 = vpack.c.b16 %v479, %v478
          %v491 = vpack.c.b16 %v481, %v480
          %v492 = vpack.c.b16 %v483, %v482
          %v493 = vpack.c.b16 %v485, %v484
          %502 = vmatprep.subr.bf16.mxu0 0
          %503 = vmatpush1.bf16.msra.mxu0 %v486
          %504 = vmatprep.subr.bf16.mxu0 0
          %505 = vmatpush1.bf16.msra.mxu0 %v487
          %506 = vmatprep.subr.bf16.mxu0 0
          %507 = vmatpush1.bf16.msra.mxu0 %v488
          %508 = vmatprep.subr.bf16.mxu0 0
          %509 = vmatpush1.bf16.msra.mxu0 %v489
          %510 = vmatprep.subr.bf16.mxu0 0
          %511 = vmatpush1.bf16.msra.mxu0 %v490
          %512 = vmatprep.subr.bf16.mxu0 0
          %513 = vmatpush1.bf16.msra.mxu0 %v491
          %514 = vmatprep.subr.bf16.mxu0 0
          %515 = vmatpush1.bf16.msra.mxu0 %v492
          %516 = vmatprep.subr.bf16.mxu0 0
          %517 = vmatpush1.bf16.msra.mxu0 %v493
          %518 = vmatprep.subr.bf16.mxu0 0
          %519 = vmatpush1.bf16.msra.mxu0 0
          %520 = vmatprep.subr.bf16.mxu0 0
          %521 = vmatpush1.bf16.msra.mxu0 0
          %522 = vmatprep.subr.bf16.mxu0 0
          %523 = vmatpush1.bf16.msra.mxu0 0
          %524 = vmatprep.subr.bf16.mxu0 0
          %525 = vmatpush1.bf16.msra.mxu0 0
          %526 = vmatprep.subr.bf16.mxu0 0
          %527 = vmatpush1.bf16.msra.mxu0 0
          %528 = vmatprep.subr.bf16.mxu0 0
          %529 = vmatpush1.bf16.msra.mxu0 0
          %530 = vmatprep.subr.bf16.mxu0 0
          %531 = vmatpush1.bf16.msra.mxu0 0
          %532 = vmatprep.subr.bf16.mxu0 0
          %533 = vmatpush1.bf16.msra.mxu0 0
          %534 = vmatprep.mubr.bf16.mxu0 0
          %535 = vmatmul.mubr.bf16.gmra.mrb[0].mxu0 %v430
          %v536 = vpop.f32.mrb[0].mxu0
          %v537 = vadd.f32 %v452, %v536
          %v538 = vpop.f32.mrb[0].mxu0
          %v539 = vpop.f32.mrb[0].mxu0
          %v540 = vpop.f32.mrb[0].mxu0
          %541 = vdwg.mxu0
          %v542 = vpack.c.bf16 %v537, %v537
          %543 = vst [vmem:[#allocation2] sm:$0xf] %v542
          %vm544 = vcmask 7168
          %545 = vst.msk [vmem:[#allocation3] sm:$0xff] %vm544, -inf
          %546 = vst.msk [vmem:[#allocation3 + $0x8] sm:$0xff] %vm544, -inf
          %547 = vst.msk [vmem:[#allocation3 + $0x10] sm:$0xff] %vm544, -inf
          %548 = vst.msk [vmem:[#allocation3 + $0x18] sm:$0xff] %vm544, -inf
          %549 = vst.msk [vmem:[#allocation4] sm:$0xff] %vm544, 0.0
          %550 = vst.msk [vmem:[#allocation4 + $0x8] sm:$0xff] %vm544, 0.0
          %551 = vst.msk [vmem:[#allocation4 + $0x10] sm:$0xff] %vm544, 0.0
          %552 = vst.msk [vmem:[#allocation4 + $0x18] sm:$0xff] %vm544, 0.0
          %553 = vst [vmem:[#allocation5] sm:$0xff] 0.0
        $region72: #{tpu_custom_call.1} parent=47 // pred_fallthru
          _
        %v554 = vld [vmem:[%s366] sm:$0xff]
        %v555 = vpack.c.bf16 %v554, %v554
        %v556 = vld [vmem:[#allocation12 + $0x4] sm:$0xf]
        %v557 = vld [vmem:[#allocation12 + $0x10] sm:$0xf]
        %v558 = vld [vmem:[#allocation12 + $0x1c] sm:$0xf]
        %v559 = vld [vmem:[#allocation12 + $0x28] sm:$0xf]
        %v560 = vld [vmem:[#allocation12 + $0x34] sm:$0xf]
        %v561 = vld [vmem:[#allocation12 + $0x40] sm:$0xf]
        %v562 = vld [vmem:[#allocation12 + $0x4c] sm:$0xf]
        %v563 = vld [vmem:[#allocation12 + $0x58] sm:$0xf]
        %v564 = vld [vmem:[#allocation12 + $0x64] sm:$0xf]
        %v565 = vld [vmem:[#allocation12 + $0x70] sm:$0xf]
        %v566 = vld [vmem:[#allocation12 + $0x7c] sm:$0xf]
        %v567 = vld [vmem:[#allocation12 + $0x88] sm:$0xf]
        %v568 = vld [vmem:[#allocation12 + $0x94] sm:$0xf]
        %v569 = vld [vmem:[#allocation12 + $0xa0] sm:$0xf]
        %v570 = vld [vmem:[#allocation12 + $0xac] sm:$0xf]
        %v571 = vld [vmem:[#allocation12 + $0xb8] sm:$0xf]
        %v572 = vld [vmem:[%s4 + $0x1] sm:$0x1]
        %v574 = vlaneseq
        %v575 = vshrl.u32 %v574, 7
        %v576 = vsub.s32 0, %v575
        %v577 = vrot.slane %v572, %v576
        %v595 = vunpack.c.l.b16 %v556
        %v596 = vunpack.c.l.b16 %v557
        %v597 = vunpack.c.l.b16 %v558
        %v598 = vunpack.c.l.b16 %v559
        %v599 = vunpack.c.l.b16 %v560
        %v600 = vunpack.c.l.b16 %v561
        %v601 = vunpack.c.l.b16 %v562
        %v602 = vunpack.c.l.b16 %v563
        %v603 = vunpack.c.l.b16 %v564
        %v604 = vunpack.c.l.b16 %v565
        %v605 = vunpack.c.l.b16 %v566
        %v606 = vunpack.c.l.b16 %v567
        %v607 = vunpack.c.l.b16 %v568
        %v608 = vunpack.c.l.b16 %v569
        %v609 = vunpack.c.l.b16 %v570
        %v610 = vunpack.c.l.b16 %v571
        %v611 = vpack.c.b16 %v596, %v595
        %v612 = vpack.c.b16 %v598, %v597
        %v613 = vpack.c.b16 %v600, %v599
        %v614 = vpack.c.b16 %v602, %v601
        %v615 = vpack.c.b16 %v604, %v603
        %v616 = vpack.c.b16 %v606, %v605
        %v617 = vpack.c.b16 %v608, %v607
        %v618 = vpack.c.b16 %v610, %v609
        %627 = vmatprep.subr.bf16.mxu0 0
        %628 = vmatpush1.bf16.msra.mxu0 %v611
        %629 = vmatprep.subr.bf16.mxu0 0
        %630 = vmatpush1.bf16.msra.mxu0 %v612
        %631 = vmatprep.subr.bf16.mxu0 0
        %632 = vmatpush1.bf16.msra.mxu0 %v613
        %633 = vmatprep.subr.bf16.mxu0 0
        %634 = vmatpush1.bf16.msra.mxu0 %v614
        %635 = vmatprep.subr.bf16.mxu0 0
        %636 = vmatpush1.bf16.msra.mxu0 %v615
        %637 = vmatprep.subr.bf16.mxu0 0
        %638 = vmatpush1.bf16.msra.mxu0 %v616
        %639 = vmatprep.subr.bf16.mxu0 0
        %640 = vmatpush1.bf16.msra.mxu0 %v617
        %641 = vmatprep.subr.bf16.mxu0 0
        %642 = vmatpush1.bf16.msra.mxu0 %v618
        %643 = vmatprep.subr.bf16.mxu0 0
        %644 = vmatpush1.bf16.msra.mxu0 0
        %645 = vmatprep.subr.bf16.mxu0 0
        %646 = vmatpush1.bf16.msra.mxu0 0
        %647 = vmatprep.subr.bf16.mxu0 0
        %648 = vmatpush1.bf16.msra.mxu0 0
        %649 = vmatprep.subr.bf16.mxu0 0
        %650 = vmatpush1.bf16.msra.mxu0 0
        %651 = vmatprep.subr.bf16.mxu0 0
        %652 = vmatpush1.bf16.msra.mxu0 0
        %653 = vmatprep.subr.bf16.mxu0 0
        %654 = vmatpush1.bf16.msra.mxu0 0
        %655 = vmatprep.subr.bf16.mxu0 0
        %656 = vmatpush1.bf16.msra.mxu0 0
        %657 = vmatprep.subr.bf16.mxu0 0
        %658 = vmatpush1.bf16.msra.mxu0 0
        %659 = vmatprep.mubr.bf16.mxu0 0
        %660 = vmatmul.mubr.bf16.gmra.mrb[0].mxu0 %v555
        %v661 = vpop.f32.mrb[0].mxu0
        %v662 = vadd.f32 %v577, %v661
        %v663 = vpop.f32.mrb[0].mxu0
        %v664 = vpop.f32.mrb[0].mxu0
        %v665 = vpop.f32.mrb[0].mxu0
        %666 = vdwg.mxu0
        %v667 = vpack.c.bf16 %v662, %v662
        %v668 = vld [vmem:[%s375] sm:$0xff]
        %v669 = vpack.c.bf16 %v668, %v668
        %v670 = vld [vmem:[#allocation12 + $0x8] sm:$0xf]
        %v671 = vld [vmem:[#allocation12 + $0x14] sm:$0xf]
        %v672 = vld [vmem:[#allocation12 + $0x20] sm:$0xf]
        %v673 = vld [vmem:[#allocation12 + $0x2c] sm:$0xf]
        %v674 = vld [vmem:[#allocation12 + $0x38] sm:$0xf]
        %v675 = vld [vmem:[#allocation12 + $0x44] sm:$0xf]
        %v676 = vld [vmem:[#allocation12 + $0x50] sm:$0xf]
        %v677 = vld [vmem:[#allocation12 + $0x5c] sm:$0xf]
        %v678 = vld [vmem:[#allocation12 + $0x68] sm:$0xf]
        %v679 = vld [vmem:[#allocation12 + $0x74] sm:$0xf]
        %v680 = vld [vmem:[#allocation12 + $0x80] sm:$0xf]
        %v681 = vld [vmem:[#allocation12 + $0x8c] sm:$0xf]
        %v682 = vld [vmem:[#allocation12 + $0x98] sm:$0xf]
        %v683 = vld [vmem:[#allocation12 + $0xa4] sm:$0xf]
        %v684 = vld [vmem:[#allocation12 + $0xb0] sm:$0xf]
        %v685 = vld [vmem:[#allocation12 + $0xbc] sm:$0xf]
        %v686 = vld [vmem:[%s4 + $0x2] sm:$0x1]
        %v688 = vlaneseq
        %v689 = vshrl.u32 %v688, 7
        %v690 = vsub.s32 0, %v689
        %v691 = vrot.slane %v686, %v690
        %v709 = vunpack.c.l.b16 %v670
        %v710 = vunpack.c.l.b16 %v671
        %v711 = vunpack.c.l.b16 %v672
        %v712 = vunpack.c.l.b16 %v673
        %v713 = vunpack.c.l.b16 %v674
        %v714 = vunpack.c.l.b16 %v675
        %v715 = vunpack.c.l.b16 %v676
        %v716 = vunpack.c.l.b16 %v677
        %v717 = vunpack.c.l.b16 %v678
        %v718 = vunpack.c.l.b16 %v679
        %v719 = vunpack.c.l.b16 %v680
        %v720 = vunpack.c.l.b16 %v681
        %v721 = vunpack.c.l.b16 %v682
        %v722 = vunpack.c.l.b16 %v683
        %v723 = vunpack.c.l.b16 %v684
        %v724 = vunpack.c.l.b16 %v685
        %v725 = vpack.c.b16 %v710, %v709
        %v726 = vpack.c.b16 %v712, %v711
        %v727 = vpack.c.b16 %v714, %v713
        %v728 = vpack.c.b16 %v716, %v715
        %v729 = vpack.c.b16 %v718, %v717
        %v730 = vpack.c.b16 %v720, %v719
        %v731 = vpack.c.b16 %v722, %v721
        %v732 = vpack.c.b16 %v724, %v723
        %741 = vmatprep.subr.bf16.mxu0 0
        %742 = vmatpush1.bf16.msra.mxu0 %v725
        %743 = vmatprep.subr.bf16.mxu0 0
        %744 = vmatpush1.bf16.msra.mxu0 %v726
        %745 = vmatprep.subr.bf16.mxu0 0
        %746 = vmatpush1.bf16.msra.mxu0 %v727
        %747 = vmatprep.subr.bf16.mxu0 0
        %748 = vmatpush1.bf16.msra.mxu0 %v728
        %749 = vmatprep.subr.bf16.mxu0 0
        %750 = vmatpush1.bf16.msra.mxu0 %v729
        %751 = vmatprep.subr.bf16.mxu0 0
        %752 = vmatpush1.bf16.msra.mxu0 %v730
        %753 = vmatprep.subr.bf16.mxu0 0
        %754 = vmatpush1.bf16.msra.mxu0 %v731
        %755 = vmatprep.subr.bf16.mxu0 0
        %756 = vmatpush1.bf16.msra.mxu0 %v732
        %757 = vmatprep.subr.bf16.mxu0 0
        %758 = vmatpush1.bf16.msra.mxu0 0
        %759 = vmatprep.subr.bf16.mxu0 0
        %760 = vmatpush1.bf16.msra.mxu0 0
        %761 = vmatprep.subr.bf16.mxu0 0
        %762 = vmatpush1.bf16.msra.mxu0 0
        %763 = vmatprep.subr.bf16.mxu0 0
        %764 = vmatpush1.bf16.msra.mxu0 0
        %765 = vmatprep.subr.bf16.mxu0 0
        %766 = vmatpush1.bf16.msra.mxu0 0
        %767 = vmatprep.subr.bf16.mxu0 0
        %768 = vmatpush1.bf16.msra.mxu0 0
        %769 = vmatprep.subr.bf16.mxu0 0
        %770 = vmatpush1.bf16.msra.mxu0 0
        %771 = vmatprep.subr.bf16.mxu0 0
        %772 = vmatpush1.bf16.msra.mxu0 0
        %773 = vmatprep.mubr.bf16.mxu0 0
        %774 = vmatmul.mubr.bf16.gmra.mrb[0].mxu0 %v669
        %v775 = vpop.f32.mrb[0].mxu0
        %v776 = vadd.f32 %v691, %v775
        %v777 = vpop.f32.mrb[0].mxu0
        %v778 = vpop.f32.mrb[0].mxu0
        %v779 = vpop.f32.mrb[0].mxu0
        %780 = vdwg.mxu0
        %v781 = vpack.c.bf16 %v776, %v776
        %v782 = vld [vmem:[#allocation2] sm:$0xf]
        %vm783 = vcmask 261120
        %v785 = vsel %vm783, %v782, 0
        %v788 = vsel %vm783, %v667, 0
        %790 = vmatprep.subr.bf16.mxu0 0
        %791 = vmatpush1.bf16.xpose.msra.mxu0 %v788
        %792 = vmatprep.subr.bf16.mxu0 0
        %793 = vmatpush1.bf16.xpose.msra.mxu0 0
        %794 = vmatprep.subr.bf16.mxu0 0
        %795 = vmatpush1.bf16.xpose.msra.mxu0 0
        %796 = vmatprep.subr.bf16.mxu0 0
        %797 = vmatpush1.bf16.xpose.msra.mxu0 0
        %798 = vmatprep.subr.bf16.mxu0 0
        %799 = vmatpush1.bf16.xpose.msra.mxu0 0
        %800 = vmatprep.subr.bf16.mxu0 0
        %801 = vmatpush1.bf16.xpose.msra.mxu0 0
        %802 = vmatprep.subr.bf16.mxu0 0
        %803 = vmatpush1.bf16.xpose.msra.mxu0 0
        %804 = vmatprep.subr.bf16.mxu0 0
        %805 = vmatpush1.bf16.xpose.msra.mxu0 0
        %806 = vmatprep.subr.bf16.mxu0 0
        %807 = vmatpush1.bf16.xpose.msra.mxu0 0
        %808 = vmatprep.subr.bf16.mxu0 0
        %809 = vmatpush1.bf16.xpose.msra.mxu0 0
        %810 = vmatprep.subr.bf16.mxu0 0
        %811 = vmatpush1.bf16.xpose.msra.mxu0 0
        %812 = vmatprep.subr.bf16.mxu0 0
        %813 = vmatpush1.bf16.xpose.msra.mxu0 0
        %814 = vmatprep.subr.bf16.mxu0 0
        %815 = vmatpush1.bf16.xpose.msra.mxu0 0
        %816 = vmatprep.subr.bf16.mxu0 0
        %817 = vmatpush1.bf16.xpose.msra.mxu0 0
        %818 = vmatprep.subr.bf16.mxu0 0
        %819 = vmatpush1.bf16.xpose.msra.mxu0 0
        %820 = vmatprep.subr.bf16.mxu0 0
        %821 = vmatpush1.bf16.xpose.msra.mxu0 0
        %822 = vmatprep.mubr.bf16.mxu0 0
        %823 = vmatmul.mubr.bf16.gmra.mrb[0].mxu0 %v785
        %v824 = vpop.f32.mrb[0].mxu0
        %v825 = vadd.f32 0.0, %v824
        %v826 = vpop.f32.mrb[0].mxu0
        %v827 = vpop.f32.mrb[0].mxu0
        %v828 = vpop.f32.mrb[0].mxu0
        %829 = vdwg.mxu0
        %v830 = vld [vmem:[#allocation3] sm:$0xff]
        %vm831 = vcmask 64512
        %v832 = vsel %vm831, %v825, -inf
        %833 = vmax.xlane.f32.xlu0 %v832
        %v834 = vpop.xlane.xlu0 %833
        %v835 = vmax.f32 %v830, %v834
        %v836 = vsub.f32 %v830, %v835
        %v837 = vmul.f32 %v836, 1.442695
        %v838 = vpow.pop %v837
        %840 = vset.pattern.permute.xlu0 0
        %841 = vperm.xlu0 %840, %v835
        %v842 = vpop.permute.xlu0 %841
        %v844 = vsub.f32 %v825, %v842
        %v845 = vmul.f32 %v844, 1.442695
        %v846 = vpow.pop %v845
        %v847 = vld [vmem:[#allocation4] sm:$0xff]
        %v848 = vmul.f32 %v838, %v847
        %v849 = vsel %vm831, %v846, 0.0
        %850 = vadd.xlane.f32.xlu0 %v849
        %v851 = vpop.xlane.xlu0 %850
        %v852 = vadd.f32 %v848, %v851
        %vm853 = vcmask 7168
        %854 = vst.msk [vmem:[#allocation4] sm:$0xff] %vm853, %v852
        %855 = vst.msk [vmem:[#allocation3] sm:$0xff] %vm853, %v835
        %v856 = vpack.c.bf16 %v846, %v846
        %v858 = vsel %vm831, %v856, 0
        %vm860 = vcmask 1043456
        %v862 = vsel %vm860, %v781, 0
        %864 = vmatprep.subr.bf16.mxu0 0
        %865 = vmatpush1.bf16.msra.mxu0 %v862
        %866 = vmatprep.subr.bf16.mxu0 0
        %867 = vmatpush1.bf16.msra.mxu0 0
        %868 = vmatprep.subr.bf16.mxu0 0
        %869 = vmatpush1.bf16.msra.mxu0 0
        %870 = vmatprep.subr.bf16.mxu0 0
        %871 = vmatpush1.bf16.msra.mxu0 0
        %872 = vmatprep.subr.bf16.mxu0 0
        %873 = vmatpush1.bf16.msra.mxu0 0
        %874 = vmatprep.subr.bf16.mxu0 0
        %875 = vmatpush1.bf16.msra.mxu0 0
        %876 = vmatprep.subr.bf16.mxu0 0
        %877 = vmatpush1.bf16.msra.mxu0 0
        %878 = vmatprep.subr.bf16.mxu0 0
        %879 = vmatpush1.bf16.msra.mxu0 0
        %880 = vmatprep.subr.bf16.mxu0 0
        %881 = vmatpush1.bf16.msra.mxu0 0
        %882 = vmatprep.subr.bf16.mxu0 0
        %883 = vmatpush1.bf16.msra.mxu0 0
        %884 = vmatprep.subr.bf16.mxu0 0
        %885 = vmatpush1.bf16.msra.mxu0 0
        %886 = vmatprep.subr.bf16.mxu0 0
        %887 = vmatpush1.bf16.msra.mxu0 0
        %888 = vmatprep.subr.bf16.mxu0 0
        %889 = vmatpush1.bf16.msra.mxu0 0
        %890 = vmatprep.subr.bf16.mxu0 0
        %891 = vmatpush1.bf16.msra.mxu0 0
        %892 = vmatprep.subr.bf16.mxu0 0
        %893 = vmatpush1.bf16.msra.mxu0 0
        %894 = vmatprep.subr.bf16.mxu0 0
        %895 = vmatpush1.bf16.msra.mxu0 0
        %896 = vmatprep.mubr.bf16.mxu0 0
        %897 = vmatmul.mubr.bf16.gmra.mrb[0].mxu0 %v858
        %v898 = vpop.f32.mrb[0].mxu0
        %v899 = vadd.f32 0.0, %v898
        %v900 = vpop.f32.mrb[0].mxu0
        %v901 = vpop.f32.mrb[0].mxu0
        %v902 = vpop.f32.mrb[0].mxu0
        %903 = vdwg.mxu0
        %v904 = vld [vmem:[#allocation5] sm:$0xff]
        %906 = vset.pattern.permute.xlu0 0
        %907 = vperm.xlu0 %906, %v838
        %v908 = vpop.permute.xlu0 %907
        %v910 = vmul.f32 %v908, %v904
        %v911 = vadd.f32 %v910, %v899
        %912 = vst.msk [vmem:[#allocation5] sm:$0xff] %vm783, %v911
        %v914 = vunpack.c.l.b16 %v782
        %v915 = vpack.c.b16 %v914, %v914
        %916 = vrot.lane.b32.xlu0 %v915, 96
        %v917 = vpop.permute.xlu0 %916
        %919 = vrot.lane.b32.xlu0 %v667, 96
        %v920 = vpop.permute.xlu0 %919
        %v922 = vsel %vm783, %v917, 0
        %v925 = vsel %vm783, %v920, 0
        %927 = vmatprep.subr.bf16.mxu0 0
        %928 = vmatpush1.bf16.xpose.msra.mxu0 %v925
        %929 = vmatprep.subr.bf16.mxu0 0
        %930 = vmatpush1.bf16.xpose.msra.mxu0 0
        %931 = vmatprep.subr.bf16.mxu0 0
        %932 = vmatpush1.bf16.xpose.msra.mxu0 0
        %933 = vmatprep.subr.bf16.mxu0 0
        %934 = vmatpush1.bf16.xpose.msra.mxu0 0
        %935 = vmatprep.subr.bf16.mxu0 0
        %936 = vmatpush1.bf16.xpose.msra.mxu0 0
        %937 = vmatprep.subr.bf16.mxu0 0
        %938 = vmatpush1.bf16.xpose.msra.mxu0 0
        %939 = vmatprep.subr.bf16.mxu0 0
        %940 = vmatpush1.bf16.xpose.msra.mxu0 0
        %941 = vmatprep.subr.bf16.mxu0 0
        %942 = vmatpush1.bf16.xpose.msra.mxu0 0
        %943 = vmatprep.subr.bf16.mxu0 0
        %944 = vmatpush1.bf16.xpose.msra.mxu0 0
        %945 = vmatprep.subr.bf16.mxu0 0
        %946 = vmatpush1.bf16.xpose.msra.mxu0 0
        %947 = vmatprep.subr.bf16.mxu0 0
        %948 = vmatpush1.bf16.xpose.msra.mxu0 0
        %949 = vmatprep.subr.bf16.mxu0 0
        %950 = vmatpush1.bf16.xpose.msra.mxu0 0
        %951 = vmatprep.subr.bf16.mxu0 0
        %952 = vmatpush1.bf16.xpose.msra.mxu0 0
        %953 = vmatprep.subr.bf16.mxu0 0
        %954 = vmatpush1.bf16.xpose.msra.mxu0 0
        %955 = vmatprep.subr.bf16.mxu0 0
        %956 = vmatpush1.bf16.xpose.msra.mxu0 0
        %957 = vmatprep.subr.bf16.mxu0 0
        %958 = vmatpush1.bf16.xpose.msra.mxu0 0
        %959 = vmatprep.mubr.bf16.mxu0 0
        %960 = vmatmul.mubr.bf16.gmra.mrb[0].mxu0 %v922
        %v961 = vpop.f32.mrb[0].mxu0
        %v962 = vadd.f32 0.0, %v961
        %v963 = vpop.f32.mrb[0].mxu0
        %v964 = vpop.f32.mrb[0].mxu0
        %v965 = vpop.f32.mrb[0].mxu0
        %966 = vdwg.mxu0
        %s967 = scalar_lea.vmem [#allocation3], 8
        %v968 = vld [vmem:[%s967] sm:$0xff]
        %v969 = vsel %vm831, %v962, -inf
        %970 = vmax.xlane.f32.xlu0 %v969
        %v971 = vpop.xlane.xlu0 %970
        %v972 = vmax.f32 %v968, %v971
        %v973 = vsub.f32 %v968, %v972
        %v974 = vmul.f32 %v973, 1.442695
        %v975 = vpow.pop %v974
        %977 = vset.pattern.permute.xlu0 0
        %978 = vperm.xlu0 %977, %v972
        %v979 = vpop.permute.xlu0 %978
        %v981 = vsub.f32 %v962, %v979
        %v982 = vmul.f32 %v981, 1.442695
        %v983 = vpow.pop %v982
        %s984 = scalar_lea.vmem [#allocation4], 8
        %v985 = vld [vmem:[%s984] sm:$0xff]
        %v986 = vmul.f32 %v975, %v985
        %v987 = vsel %vm831, %v983, 0.0
        %988 = vadd.xlane.f32.xlu0 %v987
        %v989 = vpop.xlane.xlu0 %988
        %v990 = vadd.f32 %v986, %v989
        %991 = vst.msk [vmem:[%s984] sm:$0xff] %vm853, %v990
        %992 = vst.msk [vmem:[%s967] sm:$0xff] %vm853, %v972
        %v993 = vpack.c.bf16 %v983, %v983
        %995 = vrot.lane.b32.xlu0 %v781, 96
        %v996 = vpop.permute.xlu0 %995
        %v998 = vsel %vm831, %v993, 0
        %v1001 = vsel %vm860, %v996, 0
        %1003 = vmatprep.subr.bf16.mxu0 0
        %1004 = vmatpush1.bf16.msra.mxu0 %v1001
        %1005 = vmatprep.subr.bf16.mxu0 0
        %1006 = vmatpush1.bf16.msra.mxu0 0
        %1007 = vmatprep.subr.bf16.mxu0 0
        %1008 = vmatpush1.bf16.msra.mxu0 0
        %1009 = vmatprep.subr.bf16.mxu0 0
        %1010 = vmatpush1.bf16.msra.mxu0 0
        %1011 = vmatprep.subr.bf16.mxu0 0
        %1012 = vmatpush1.bf16.msra.mxu0 0
        %1013 = vmatprep.subr.bf16.mxu0 0
        %1014 = vmatpush1.bf16.msra.mxu0 0
        %1015 = vmatprep.subr.bf16.mxu0 0
        %1016 = vmatpush1.bf16.msra.mxu0 0
        %1017 = vmatprep.subr.bf16.mxu0 0
        %1018 = vmatpush1.bf16.msra.mxu0 0
        %1019 = vmatprep.subr.bf16.mxu0 0
        %1020 = vmatpush1.bf16.msra.mxu0 0
        %1021 = vmatprep.subr.bf16.mxu0 0
        %1022 = vmatpush1.bf16.msra.mxu0 0
        %1023 = vmatprep.subr.bf16.mxu0 0
        %1024 = vmatpush1.bf16.msra.mxu0 0
        %1025 = vmatprep.subr.bf16.mxu0 0
        %1026 = vmatpush1.bf16.msra.mxu0 0
        %1027 = vmatprep.subr.bf16.mxu0 0
        %1028 = vmatpush1.bf16.msra.mxu0 0
        %1029 = vmatprep.subr.bf16.mxu0 0
        %1030 = vmatpush1.bf16.msra.mxu0 0
        %1031 = vmatprep.subr.bf16.mxu0 0
        %1032 = vmatpush1.bf16.msra.mxu0 0
        %1033 = vmatprep.subr.bf16.mxu0 0
        %1034 = vmatpush1.bf16.msra.mxu0 0
        %1035 = vmatprep.mubr.bf16.mxu0 0
        %1036 = vmatmul.mubr.bf16.gmra.mrb[0].mxu0 %v998
        %v1037 = vpop.f32.mrb[0].mxu0
        %v1038 = vadd.f32 0.0, %v1037
        %v1039 = vpop.f32.mrb[0].mxu0
        %v1040 = vpop.f32.mrb[0].mxu0
        %v1041 = vpop.f32.mrb[0].mxu0
        %1042 = vdwg.mxu0
        %v1043 = vld [vmem:[#allocation5] sm:$0xff]
        %1045 = vset.pattern.permute.xlu0 0
        %1046 = vperm.xlu0 %1045, %v975
        %v1047 = vpop.permute.xlu0 %1046
        %v1049 = vmul.f32 %v1047, %v1043
        %1051 = vrot.lane.b32.xlu0 %v1038, 32
        %v1052 = vpop.permute.xlu0 %1051
        %v1054 = vadd.f32 %v1049, %v1052
        %vm1055 = vcmask 523520
        %1056 = vst.msk [vmem:[#allocation5] sm:$0xff] %vm1055, %v1054
        %1057 = vrot.lane.b32.xlu0 %v915, 64
        %v1058 = vpop.permute.xlu0 %1057
        %1059 = vrot.lane.b32.xlu0 %v667, 64
        %v1060 = vpop.permute.xlu0 %1059
        %v1062 = vsel %vm783, %v1058, 0
        %v1065 = vsel %vm783, %v1060, 0
        %1067 = vmatprep.subr.bf16.mxu0 0
        %1068 = vmatpush1.bf16.xpose.msra.mxu0 %v1065
        %1069 = vmatprep.subr.bf16.mxu0 0
        %1070 = vmatpush1.bf16.xpose.msra.mxu0 0
        %1071 = vmatprep.subr.bf16.mxu0 0
        %1072 = vmatpush1.bf16.xpose.msra.mxu0 0
        %1073 = vmatprep.subr.bf16.mxu0 0
        %1074 = vmatpush1.bf16.xpose.msra.mxu0 0
        %1075 = vmatprep.subr.bf16.mxu0 0
        %1076 = vmatpush1.bf16.xpose.msra.mxu0 0
        %1077 = vmatprep.subr.bf16.mxu0 0
        %1078 = vmatpush1.bf16.xpose.msra.mxu0 0
        %1079 = vmatprep.subr.bf16.mxu0 0
        %1080 = vmatpush1.bf16.xpose.msra.mxu0 0
        %1081 = vmatprep.subr.bf16.mxu0 0
        %1082 = vmatpush1.bf16.xpose.msra.mxu0 0
        %1083 = vmatprep.subr.bf16.mxu0 0
        %1084 = vmatpush1.bf16.xpose.msra.mxu0 0
        %1085 = vmatprep.subr.bf16.mxu0 0
        %1086 = vmatpush1.bf16.xpose.msra.mxu0 0
        %1087 = vmatprep.subr.bf16.mxu0 0
        %1088 = vmatpush1.bf16.xpose.msra.mxu0 0
        %1089 = vmatprep.subr.bf16.mxu0 0
        %1090 = vmatpush1.bf16.xpose.msra.mxu0 0
        %1091 = vmatprep.subr.bf16.mxu0 0
        %1092 = vmatpush1.bf16.xpose.msra.mxu0 0
        %1093 = vmatprep.subr.bf16.mxu0 0
        %1094 = vmatpush1.bf16.xpose.msra.mxu0 0
        %1095 = vmatprep.subr.bf16.mxu0 0
        %1096 = vmatpush1.bf16.xpose.msra.mxu0 0
        %1097 = vmatprep.subr.bf16.mxu0 0
        %1098 = vmatpush1.bf16.xpose.msra.mxu0 0
        %1099 = vmatprep.mubr.bf16.mxu0 0
        %1100 = vmatmul.mubr.bf16.gmra.mrb[0].mxu0 %v1062
        %v1101 = vpop.f32.mrb[0].mxu0
        %v1102 = vadd.f32 0.0, %v1101
        %v1103 = vpop.f32.mrb[0].mxu0
        %v1104 = vpop.f32.mrb[0].mxu0
        %v1105 = vpop.f32.mrb[0].mxu0
        %1106 = vdwg.mxu0
        %s1107 = scalar_lea.vmem [#allocation3], 16
        %v1108 = vld [vmem:[%s1107] sm:$0xff]
        %v1109 = vsel %vm831, %v1102, -inf
        %1110 = vmax.xlane.f32.xlu0 %v1109
        %v1111 = vpop.xlane.xlu0 %1110
        %v1112 = vmax.f32 %v1108, %v1111
        %v1113 = vsub.f32 %v1108, %v1112
        %v1114 = vmul.f32 %v1113, 1.442695
        %v1115 = vpow.pop %v1114
        %1117 = vset.pattern.permute.xlu0 0
        %1118 = vperm.xlu0 %1117, %v1112
        %v1119 = vpop.permute.xlu0 %1118
        %v1121 = vsub.f32 %v1102, %v1119
        %v1122 = vmul.f32 %v1121, 1.442695
        %v1123 = vpow.pop %v1122
        %s1124 = scalar_lea.vmem [#allocation4], 16
        %v1125 = vld [vmem:[%s1124] sm:$0xff]
        %v1126 = vmul.f32 %v1115, %v1125
        %v1127 = vsel %vm831, %v1123, 0.0
        %1128 = vadd.xlane.f32.xlu0 %v1127
        %v1129 = vpop.xlane.xlu0 %1128
        %v1130 = vadd.f32 %v1126, %v1129
        %1131 = vst.msk [vmem:[%s1124] sm:$0xff] %vm853, %v1130
        %1132 = vst.msk [vmem:[%s1107] sm:$0xff] %vm853, %v1112
        %v1133 = vpack.c.bf16 %v1123, %v1123
        %1134 = vrot.lane.b32.xlu0 %v781, 64
        %v1135 = vpop.permute.xlu0 %1134
        %v1137 = vsel %vm831, %v1133, 0
        %v1140 = vsel %vm860, %v1135, 0
        %1142 = vmatprep.subr.bf16.mxu0 0
        %1143 = vmatpush1.bf16.msra.mxu0 %v1140
        %1144 = vmatprep.subr.bf16.mxu0 0
        %1145 = vmatpush1.bf16.msra.mxu0 0
        %1146 = vmatprep.subr.bf16.mxu0 0
        %1147 = vmatpush1.bf16.msra.mxu0 0
        %1148 = vmatprep.subr.bf16.mxu0 0
        %1149 = vmatpush1.bf16.msra.mxu0 0
        %1150 = vmatprep.subr.bf16.mxu0 0
        %1151 = vmatpush1.bf16.msra.mxu0 0
        %1152 = vmatprep.subr.bf16.mxu0 0
        %1153 = vmatpush1.bf16.msra.mxu0 0
        %1154 = vmatprep.subr.bf16.mxu0 0
        %1155 = vmatpush1.bf16.msra.mxu0 0
        %1156 = vmatprep.subr.bf16.mxu0 0
        %1157 = vmatpush1.bf16.msra.mxu0 0
        %1158 = vmatprep.subr.bf16.mxu0 0
        %1159 = vmatpush1.bf16.msra.mxu0 0
        %1160 = vmatprep.subr.bf16.mxu0 0
        %1161 = vmatpush1.bf16.msra.mxu0 0
        %1162 = vmatprep.subr.bf16.mxu0 0
        %1163 = vmatpush1.bf16.msra.mxu0 0
        %1164 = vmatprep.subr.bf16.mxu0 0
        %1165 = vmatpush1.bf16.msra.mxu0 0
        %1166 = vmatprep.subr.bf16.mxu0 0
        %1167 = vmatpush1.bf16.msra.mxu0 0
        %1168 = vmatprep.subr.bf16.mxu0 0
        %1169 = vmatpush1.bf16.msra.mxu0 0
        %1170 = vmatprep.subr.bf16.mxu0 0
        %1171 = vmatpush1.bf16.msra.mxu0 0
        %1172 = vmatprep.subr.bf16.mxu0 0
        %1173 = vmatpush1.bf16.msra.mxu0 0
        %1174 = vmatprep.mubr.bf16.mxu0 0
        %1175 = vmatmul.mubr.bf16.gmra.mrb[0].mxu0 %v1137
        %v1176 = vpop.f32.mrb[0].mxu0
        %v1177 = vadd.f32 0.0, %v1176
        %v1178 = vpop.f32.mrb[0].mxu0
        %v1179 = vpop.f32.mrb[0].mxu0
        %v1180 = vpop.f32.mrb[0].mxu0
        %1181 = vdwg.mxu0
        %v1182 = vld [vmem:[#allocation5] sm:$0xff]
        %1184 = vset.pattern.permute.xlu0 0
        %1185 = vperm.xlu0 %1184, %v1115
        %v1186 = vpop.permute.xlu0 %1185
        %v1188 = vmul.f32 %v1186, %v1182
        %1190 = vrot.lane.b32.xlu0 %v1177, 64
        %v1191 = vpop.permute.xlu0 %1190
        %v1193 = vadd.f32 %v1188, %v1191
        %vm1194 = vcmask 785920
        %1195 = vst.msk [vmem:[#allocation5] sm:$0xff] %vm1194, %v1193
        %1196 = vrot.lane.b32.xlu0 %v915, 32
        %v1197 = vpop.permute.xlu0 %1196
        %1198 = vrot.lane.b32.xlu0 %v667, 32
        %v1199 = vpop.permute.xlu0 %1198
        %v1201 = vsel %vm783, %v1197, 0
        %v1204 = vsel %vm783, %v1199, 0
        %1206 = vmatprep.subr.bf16.mxu0 0
        %1207 = vmatpush1.bf16.xpose.msra.mxu0 %v1204
        %1208 = vmatprep.subr.bf16.mxu0 0
        %1209 = vmatpush1.bf16.xpose.msra.mxu0 0
        %1210 = vmatprep.subr.bf16.mxu0 0
        %1211 = vmatpush1.bf16.xpose.msra.mxu0 0
        %1212 = vmatprep.subr.bf16.mxu0 0
        %1213 = vmatpush1.bf16.xpose.msra.mxu0 0
        %1214 = vmatprep.subr.bf16.mxu0 0
        %1215 = vmatpush1.bf16.xpose.msra.mxu0 0
        %1216 = vmatprep.subr.bf16.mxu0 0
        %1217 = vmatpush1.bf16.xpose.msra.mxu0 0
        %1218 = vmatprep.subr.bf16.mxu0 0
        %1219 = vmatpush1.bf16.xpose.msra.mxu0 0
        %1220 = vmatprep.subr.bf16.mxu0 0
        %1221 = vmatpush1.bf16.xpose.msra.mxu0 0
        %1222 = vmatprep.subr.bf16.mxu0 0
        %1223 = vmatpush1.bf16.xpose.msra.mxu0 0
        %1224 = vmatprep.subr.bf16.mxu0 0
        %1225 = vmatpush1.bf16.xpose.msra.mxu0 0
        %1226 = vmatprep.subr.bf16.mxu0 0
        %1227 = vmatpush1.bf16.xpose.msra.mxu0 0
        %1228 = vmatprep.subr.bf16.mxu0 0
        %1229 = vmatpush1.bf16.xpose.msra.mxu0 0
        %1230 = vmatprep.subr.bf16.mxu0 0
        %1231 = vmatpush1.bf16.xpose.msra.mxu0 0
        %1232 = vmatprep.subr.bf16.mxu0 0
        %1233 = vmatpush1.bf16.xpose.msra.mxu0 0
        %1234 = vmatprep.subr.bf16.mxu0 0
        %1235 = vmatpush1.bf16.xpose.msra.mxu0 0
        %1236 = vmatprep.subr.bf16.mxu0 0
        %1237 = vmatpush1.bf16.xpose.msra.mxu0 0
        %1238 = vmatprep.mubr.bf16.mxu0 0
        %1239 = vmatmul.mubr.bf16.gmra.mrb[0].mxu0 %v1201
        %v1240 = vpop.f32.mrb[0].mxu0
        %v1241 = vadd.f32 0.0, %v1240
        %v1242 = vpop.f32.mrb[0].mxu0
        %v1243 = vpop.f32.mrb[0].mxu0
        %v1244 = vpop.f32.mrb[0].mxu0
        %1245 = vdwg.mxu0
        %s1246 = scalar_lea.vmem [#allocation3], 24
        %v1247 = vld [vmem:[%s1246] sm:$0xff]
        %v1248 = vsel %vm831, %v1241, -inf
        %1249 = vmax.xlane.f32.xlu0 %v1248
        %v1250 = vpop.xlane.xlu0 %1249
        %v1251 = vmax.f32 %v1247, %v1250
        %v1252 = vsub.f32 %v1247, %v1251
        %v1253 = vmul.f32 %v1252, 1.442695
        %v1254 = vpow.pop %v1253
        %1256 = vset.pattern.permute.xlu0 0
        %1257 = vperm.xlu0 %1256, %v1251
        %v1258 = vpop.permute.xlu0 %1257
        %v1260 = vsub.f32 %v1241, %v1258
        %v1261 = vmul.f32 %v1260, 1.442695
        %v1262 = vpow.pop %v1261
        %s1263 = scalar_lea.vmem [#allocation4], 24
        %v1264 = vld [vmem:[%s1263] sm:$0xff]
        %v1265 = vmul.f32 %v1254, %v1264
        %v1266 = vsel %vm831, %v1262, 0.0
        %1267 = vadd.xlane.f32.xlu0 %v1266
        %v1268 = vpop.xlane.xlu0 %1267
        %v1269 = vadd.f32 %v1265, %v1268
        %1270 = vst.msk [vmem:[%s1263] sm:$0xff] %vm853, %v1269
        %1271 = vst.msk [vmem:[%s1246] sm:$0xff] %vm853, %v1251
        %v1272 = vpack.c.bf16 %v1262, %v1262
        %1273 = vrot.lane.b32.xlu0 %v781, 32
        %v1274 = vpop.permute.xlu0 %1273
        %v1276 = vsel %vm831, %v1272, 0
        %v1279 = vsel %vm860, %v1274, 0
        %1281 = vmatprep.subr.bf16.mxu0 0
        %1282 = vmatpush1.bf16.msra.mxu0 %v1279
        %1283 = vmatprep.subr.bf16.mxu0 0
        %1284 = vmatpush1.bf16.msra.mxu0 0
        %1285 = vmatprep.subr.bf16.mxu0 0
        %1286 = vmatpush1.bf16.msra.mxu0 0
        %1287 = vmatprep.subr.bf16.mxu0 0
        %1288 = vmatpush1.bf16.msra.mxu0 0
        %1289 = vmatprep.subr.bf16.mxu0 0
        %1290 = vmatpush1.bf16.msra.mxu0 0
        %1291 = vmatprep.subr.bf16.mxu0 0
        %1292 = vmatpush1.bf16.msra.mxu0 0
        %1293 = vmatprep.subr.bf16.mxu0 0
        %1294 = vmatpush1.bf16.msra.mxu0 0
        %1295 = vmatprep.subr.bf16.mxu0 0
        %1296 = vmatpush1.bf16.msra.mxu0 0
        %1297 = vmatprep.subr.bf16.mxu0 0
        %1298 = vmatpush1.bf16.msra.mxu0 0
        %1299 = vmatprep.subr.bf16.mxu0 0
        %1300 = vmatpush1.bf16.msra.mxu0 0
        %1301 = vmatprep.subr.bf16.mxu0 0
        %1302 = vmatpush1.bf16.msra.mxu0 0
        %1303 = vmatprep.subr.bf16.mxu0 0
        %1304 = vmatpush1.bf16.msra.mxu0 0
        %1305 = vmatprep.subr.bf16.mxu0 0
        %1306 = vmatpush1.bf16.msra.mxu0 0
        %1307 = vmatprep.subr.bf16.mxu0 0
        %1308 = vmatpush1.bf16.msra.mxu0 0
        %1309 = vmatprep.subr.bf16.mxu0 0
        %1310 = vmatpush1.bf16.msra.mxu0 0
        %1311 = vmatprep.subr.bf16.mxu0 0
        %1312 = vmatpush1.bf16.msra.mxu0 0
        %1313 = vmatprep.mubr.bf16.mxu0 0
        %1314 = vmatmul.mubr.bf16.gmra.mrb[0].mxu0 %v1276
        %v1315 = vpop.f32.mrb[0].mxu0
        %v1316 = vadd.f32 0.0, %v1315
        %v1317 = vpop.f32.mrb[0].mxu0
        %v1318 = vpop.f32.mrb[0].mxu0
        %v1319 = vpop.f32.mrb[0].mxu0
        %1320 = vdwg.mxu0
        %v1321 = vld [vmem:[#allocation5] sm:$0xff]
        %1323 = vset.pattern.permute.xlu0 0
        %1324 = vperm.xlu0 %1323, %v1254
        %v1325 = vpop.permute.xlu0 %1324
        %v1327 = vmul.f32 %v1325, %v1321
        %1329 = vrot.lane.b32.xlu0 %v1316, 96
        %v1330 = vpop.permute.xlu0 %1329
        %v1332 = vadd.f32 %v1327, %v1330
        %vm1333 = vcmask 1048320
        %1334 = vst.msk [vmem:[#allocation5] sm:$0xff] %vm1333, %v1332
        // Predicated region
        $region73: #{tpu_custom_call.1} parent=47 // pred_check
          %p1335 = pneg %p425
        $region74: #{tpu_custom_call.1} parent=47 // pred_check_branch
          %1337 = sbr.rel (%p1335) target = $region76
        $region75: #{tpu_custom_call.1} parent=47 // pred_region
          %v1338 = vld [vmem:[#allocation4] sm:$0xff]
          %v1339 = vrcp.pop %v1338
          %v1340 = vld [vmem:[#allocation5] sm:$0xff]
          %1342 = vset.pattern.permute.xlu0 0
          %1343 = vperm.xlu0 %1342, %v1339
          %v1344 = vpop.permute.xlu0 %1343
          %v1346 = vmul.f32 %v1340, %v1344
          %1347 = vst.msk [vmem:[#allocation5] sm:$0xff] %vm783, %v1346
          %v1348 = vld [vmem:[%s984] sm:$0xff]
          %v1349 = vrcp.pop %v1348
          %v1350 = vld [vmem:[#allocation5] sm:$0xff]
          %1352 = vset.pattern.permute.xlu0 0
          %1353 = vperm.xlu0 %1352, %v1349
          %v1354 = vpop.permute.xlu0 %1353
          %v1356 = vmul.f32 %v1350, %v1354
          %1357 = vst.msk [vmem:[#allocation5] sm:$0xff] %vm1055, %v1356
          %v1358 = vld [vmem:[%s1124] sm:$0xff]
          %v1359 = vrcp.pop %v1358
          %v1360 = vld [vmem:[#allocation5] sm:$0xff]
          %1362 = vset.pattern.permute.xlu0 0
          %1363 = vperm.xlu0 %1362, %v1359
          %v1364 = vpop.permute.xlu0 %1363
          %v1366 = vmul.f32 %v1360, %v1364
          %1367 = vst.msk [vmem:[#allocation5] sm:$0xff] %vm1194, %v1366
          %v1368 = vld [vmem:[%s1263] sm:$0xff]
          %v1369 = vrcp.pop %v1368
          %v1370 = vld [vmem:[#allocation5] sm:$0xff]
          %1372 = vset.pattern.permute.xlu0 0
          %1373 = vperm.xlu0 %1372, %v1369
          %v1374 = vpop.permute.xlu0 %1373
          %v1376 = vmul.f32 %v1370, %v1374
          %1377 = vst.msk [vmem:[#allocation5] sm:$0xff] %vm1333, %v1376
          %v1378 = vld [vmem:[#allocation5] sm:$0xff]
          %v1379 = vpack.c.bf16 %v1378, %v1378
          %v1380 = vld [vmem:[#allocation14] sm:$0xf]
          %v1381 = vld [vmem:[#allocation14 + $0x4] sm:$0xf]
          %v1382 = vld [vmem:[#allocation14 + $0x8] sm:$0xf]
          %v1383 = vld [vmem:[#allocation14 + $0xc] sm:$0xf]
          %v1384 = vld [vmem:[#allocation14 + $0x10] sm:$0xf]
          %v1385 = vld [vmem:[#allocation14 + $0x14] sm:$0xf]
          %v1386 = vld [vmem:[#allocation14 + $0x18] sm:$0xf]
          %v1387 = vld [vmem:[#allocation14 + $0x1c] sm:$0xf]
          %v1388 = vld [vmem:[#allocation14 + $0x20] sm:$0xf]
          %v1389 = vld [vmem:[#allocation14 + $0x24] sm:$0xf]
          %v1390 = vld [vmem:[#allocation14 + $0x28] sm:$0xf]
          %v1391 = vld [vmem:[#allocation14 + $0x2c] sm:$0xf]
          %v1392 = vld [vmem:[#allocation14 + $0x30] sm:$0xf]
          %v1393 = vld [vmem:[#allocation14 + $0x34] sm:$0xf]
          %v1394 = vld [vmem:[#allocation14 + $0x38] sm:$0xf]
          %v1395 = vld [vmem:[#allocation14 + $0x3c] sm:$0xf]
          %v1396 = vld [vmem:[%s6] sm:$0x1]
          %v1398 = vlaneseq
          %v1399 = vshrl.u32 %v1398, 7
          %v1400 = vsub.s32 0, %v1399
          %v1401 = vrot.slane %v1396, %v1400
          %v1419 = vunpack.c.l.b16 %v1380
          %v1420 = vunpack.c.l.b16 %v1381
          %v1421 = vunpack.c.l.b16 %v1382
          %v1422 = vunpack.c.l.b16 %v1383
          %v1423 = vunpack.c.l.b16 %v1384
          %v1424 = vunpack.c.l.b16 %v1385
          %v1425 = vunpack.c.l.b16 %v1386
          %v1426 = vunpack.c.l.b16 %v1387
          %v1427 = vunpack.c.l.b16 %v1388
          %v1428 = vunpack.c.l.b16 %v1389
          %v1429 = vunpack.c.l.b16 %v1390
          %v1430 = vunpack.c.l.b16 %v1391
          %v1431 = vunpack.c.l.b16 %v1392
          %v1432 = vunpack.c.l.b16 %v1393
          %v1433 = vunpack.c.l.b16 %v1394
          %v1434 = vunpack.c.l.b16 %v1395
          %v1435 = vpack.c.b16 %v1420, %v1419
          %v1436 = vpack.c.b16 %v1422, %v1421
          %v1437 = vpack.c.b16 %v1424, %v1423
          %v1438 = vpack.c.b16 %v1426, %v1425
          %v1439 = vpack.c.b16 %v1428, %v1427
          %v1440 = vpack.c.b16 %v1430, %v1429
          %v1441 = vpack.c.b16 %v1432, %v1431
          %v1442 = vpack.c.b16 %v1434, %v1433
          %1451 = vmatprep.subr.bf16.mxu0 0
          %1452 = vmatpush1.bf16.msra.mxu0 %v1435
          %1453 = vmatprep.subr.bf16.mxu0 0
          %1454 = vmatpush1.bf16.msra.mxu0 %v1436
          %1455 = vmatprep.subr.bf16.mxu0 0
          %1456 = vmatpush1.bf16.msra.mxu0 %v1437
          %1457 = vmatprep.subr.bf16.mxu0 0
          %1458 = vmatpush1.bf16.msra.mxu0 %v1438
          %1459 = vmatprep.subr.bf16.mxu0 0
          %1460 = vmatpush1.bf16.msra.mxu0 %v1439
          %1461 = vmatprep.subr.bf16.mxu0 0
          %1462 = vmatpush1.bf16.msra.mxu0 %v1440
          %1463 = vmatprep.subr.bf16.mxu0 0
          %1464 = vmatpush1.bf16.msra.mxu0 %v1441
          %1465 = vmatprep.subr.bf16.mxu0 0
          %1466 = vmatpush1.bf16.msra.mxu0 %v1442
          %1467 = vmatprep.subr.bf16.mxu0 0
          %1468 = vmatpush1.bf16.msra.mxu0 0
          %1469 = vmatprep.subr.bf16.mxu0 0
          %1470 = vmatpush1.bf16.msra.mxu0 0
          %1471 = vmatprep.subr.bf16.mxu0 0
          %1472 = vmatpush1.bf16.msra.mxu0 0
          %1473 = vmatprep.subr.bf16.mxu0 0
          %1474 = vmatpush1.bf16.msra.mxu0 0
          %1475 = vmatprep.subr.bf16.mxu0 0
          %1476 = vmatpush1.bf16.msra.mxu0 0
          %1477 = vmatprep.subr.bf16.mxu0 0
          %1478 = vmatpush1.bf16.msra.mxu0 0
          %1479 = vmatprep.subr.bf16.mxu0 0
          %1480 = vmatpush1.bf16.msra.mxu0 0
          %1481 = vmatprep.subr.bf16.mxu0 0
          %1482 = vmatpush1.bf16.msra.mxu0 0
          %1483 = vmatprep.mubr.bf16.mxu0 0
          %1484 = vmatmul.mubr.bf16.gmra.mrb[0].mxu0 %v1379
          %v1485 = vpop.f32.mrb[0].mxu0
          %v1486 = vadd.f32 %v1401, %v1485
          %v1487 = vpop.f32.mrb[0].mxu0
          %v1488 = vpop.f32.mrb[0].mxu0
          %v1489 = vpop.f32.mrb[0].mxu0
          %1490 = vdwg.mxu0
          %1491 = vst [vmem:[%s423] sm:$0xff] %v1486
        $region76: #{tpu_custom_call.1} parent=47 // pred_fallthru
          _
        %s1492 = sand.u32 %s225, 1
        %s1493 = scalar_lea.sflag [#allocation8], %s1492
        %s1494 = sand.u32 %s225, 1
        %s1495 = smul.addr %s1494, 8
        %s1496 = scalar_lea.vmem [#allocation15], %s1495
        // Predicated region
        $region77: #{tpu_custom_call.1} parent=47 // pred_check
          %p1497 = pneg %p235
        $region78: #{tpu_custom_call.1} parent=47 // pred_check_branch
          %1499 = sbr.rel (%p1497) target = $region80
        $region79: #{tpu_custom_call.1} parent=47 // pred_region
          %s1501 = ssub.s32 128, 128
          %1502 = vsyncadd %s1493, %s1501
          %s1503 = sadd.s32 %s34, %s33
          %s1504 = smul.addr %s1503, 128
          %s1505 = scalar_lea.hbm %s7, %s1504
          %s1507 = sshll.u32 %s1496, 4
          %s1508 = int_to_ptr.vmem [resolvable:$true] %s1507
          %1510 = dma.vmem_to_hbm [thread:$0]  %s1508, 128, %s1505, %s1493
        $region80: #{tpu_custom_call.1} parent=47 // pred_fallthru
          _
      $region48: #{tpu_custom_call.1} parent=5 // pred_fallthru
        _
      %p1511 = scmp.le.s32.totalorder 2, %s23
      // Predicated region
      $region81: #{tpu_custom_call.1} parent=5 // pred_check
        %p1512 = pneg %p1511
      $region82: #{tpu_custom_call.1} parent=5 // pred_check_branch
        %1514 = sbr.rel (%p1512) target = $region84
      $region83: #{tpu_custom_call.1} parent=5 // pred_region
        %s1515 = ssub.s32 %s23, 2
        // Predicated region
        $region85: #{tpu_custom_call.1} parent=83 // pred_check
          %p1516 = pneg %p241
        $region86: #{tpu_custom_call.1} parent=83 // pred_check_branch
          %1518 = sbr.rel (%p1516) target = $region88
        $region87: #{tpu_custom_call.1} parent=83 // pred_region
          %s1519 = sand.u32 %s226, 1
          %s1520 = scalar_lea.sflag [#allocation8], %s1519
          %s1521 = sand.u32 %s226, 1
          %s1522 = smul.addr %s1521, 8
          %s1523 = scalar_lea.vmem [#allocation15], %s1522
          %1524 = dma.done %s1520, 128
        $region88: #{tpu_custom_call.1} parent=83 // pred_fallthru
          _
      $region84: #{tpu_custom_call.1} parent=5 // pred_fallthru
        _
    $region6: #{tpu_custom_call.1} parent=1 // loop_footer
      %s27 = sadd.s32 1, %s23
    $region7: #{tpu_custom_call.1} parent=1 // loop_footer_branch
      %22 = sbr.rel target = $region3
    $region8: #{tpu_custom_call.1} parent=1 // loop_exit
      _
    %1525 = vsyncpa [#allocation7], 1
    %s1526 = scalar_lea.sflag [#allocation7], 1
    %1527 = vsyncpa %s1526, 1
    %1528 = vsyncpa [#allocation10], 1
    %s1529 = scalar_lea.sflag [#allocation10], 1
    %1530 = vsyncpa %s1529, 1
    %1531 = vsyncpa [#allocation13], 1
    %1532 = vsyncpa [#allocation8], 1
    %s1533 = scalar_lea.sflag [#allocation8], 1
    %1534 = vsyncpa %s1533, 1

</llo_original>
